<compile_context>
chip_gen: v7x
topology: tpu7x:2x2x1
jax: 0.10.0
libtpu: 0.0.40
codegen_flags: <defaults>
</compile_context>

<pallas_src>
import jax
import jax.numpy as jnp
from jax import lax
from jax.experimental import pallas as pl
from jax.experimental.pallas import tpu as pltpu

LANES = 128
EPS = 1e-6

# Packed-parameter lane layout of the single (8, 512) f32 block:
#   lanes [  0:128) : W1        (sublane 0 = output-gate ANN, sublane 1 = loss-gate ANN)
#   lanes [128:256) : B1
#   lanes [256:384) : 0.5 * W2  (pre-scaled so sigmoid is one fused tanh)
#   lane   384      : 0.5 * b2  (row 0 = b2_o, row 1 = b2_l)
#   lane   385      : scalars   (row 0 = c_mean, 1 = 1/c_std, 2 = i, 3 = 1-i, 4 = c0)
_W1_OFF, _B1_OFF, _W2_OFF, _B2_LANE, _SC_LANE = 0, 128, 256, 384, 385
_P_WIDTH = 512

# Packed output lane layout (lanes 0..8 of every (1,128) output row):
#   0:h  1:c  2:l  3:lc  4:bp  5:oo  6:ol  7:olc  8:f
_N_OUT = 9


# -----------------------------------------------------------------------------
# Pallas kernel: one grid step = one time chunk of `Tc` steps.
# -----------------------------------------------------------------------------
def _mcpbrnn_kernel(x_ref, pet_ref, p_ref, out_ref, c_ref):
    Tc = x_ref.shape[0]
    n_blk = Tc // 8

    # --- loop-invariant parameter views (read once per chunk, live in vregs) --
    W1 = p_ref[:, _W1_OFF:_W1_OFF + LANES]          # (8,128)
    B1 = p_ref[:, _B1_OFF:_B1_OFF + LANES]          # (8,128)
    W2h = p_ref[:, _W2_OFF:_W2_OFF + LANES]         # (8,128)  already 0.5*W2
    b2h = p_ref[:, _B2_LANE:_B2_LANE + 1]           # (8,1)    already 0.5*b2
    sc = p_ref[:, _SC_LANE:_SC_LANE + 1]            # (8,1)    scalar column

    c_mean = sc[0:1, :]
    inv_std = sc[1:2, :]
    i_gate = sc[2:3, :]
    one_m_i = sc[3:4, :]
    c0 = sc[4:5, :]

    @pl.when(pl.program_id(0) == 0)
    def _():
        c_ref[...] = c0

    # one-hot lane selectors for packing the 9 per-step outputs (hoisted,
    # JAX does not CSE broadcast_in_dim inside the loop)
    lane = lax.broadcasted_iota(jnp.int32, (1, LANES), 1)
    sel = [(lane == k).astype(jnp.float32) for k in range(_N_OUT)]

    def step(t, c_prev):
        x_t = x_ref[pl.ds(t, 1), :]                 # (1,1)
        pet_t = pet_ref[pl.ds(t, 1), :]             # (1,1)

        # Hoisted off the tail of the critical path: only depends on c_prev,
        # so the divide overlaps with the gate-ANN tanh/reduce chain below.
        inv_cp = 1.0 / (c_prev + EPS)               # (1,1)

        cn = (c_prev - c_mean) * inv_std            # (1,1)

        # fused output+loss gate ANN: one vreg tanh / one lane reduce / one tanh
        hid = jnp.tanh(W1 * cn + B1)                            # (8,128) = 1 vreg
        preh = jnp.sum(W2h * hid, axis=1, keepdims=True)        # (8,1)  XLU reduce
        g = 0.5 * jnp.tanh(preh + b2h) + 0.5                    # sigmoid(W2.hid+b2)
        oo = g[0:1, :]                                          # (1,1)
        ol = g[1:2, :]                                          # (1,1)

        l_t = ol * c_prev
        lc_t = jnp.minimum(l_t, pet_t)
        olc = lc_t * inv_cp
        f_t = 1.0 - oo - olc
        h_t = oo * c_prev
        bp_t = one_m_i * x_t
        c_new = f_t * c_prev + i_gate * x_t

        # pack the 9 outputs into one lane-dense (1,128) row -> single unmasked store
        row = (h_t * sel[0] + c_new * sel[1] + l_t * sel[2]
               + lc_t * sel[3] + bp_t * sel[4] + oo * sel[5]
               + ol * sel[6] + olc * sel[7] + f_t * sel[8])
        out_ref[pl.ds(t, 1), :] = row
        return c_new

    def block(blk, c_carry):
        base = pl.multiple_of(blk * 8, 8)
        c = c_carry
        for s in range(8):                          # Python-unrolled 8 steps
            c = step(base + s, c)
        return c

    c_ref[...] = lax.fori_loop(0, n_blk, block, c_ref[...])


# -----------------------------------------------------------------------------
# Wrapper
# -----------------------------------------------------------------------------
def _round_up(n, m):
    return -(-n // m) * m


def _pack_params(params, c_mean, c_std):
    w1o = jnp.asarray(params["w1_o"], jnp.float32).reshape(-1)
    b1o = jnp.asarray(params["b1_o"], jnp.float32).reshape(-1)
    w2o = jnp.asarray(params["w2_o"], jnp.float32).reshape(-1)
    w1l = jnp.asarray(params["w1_l"], jnp.float32).reshape(-1)
    b1l = jnp.asarray(params["b1_l"], jnp.float32).reshape(-1)
    w2l = jnp.asarray(params["w2_l"], jnp.float32).reshape(-1)
    go, gl = w1o.shape[0], w1l.shape[0]
    assert go <= LANES and gl <= LANES, "gate ANN wider than 128 not supported"

    i_gate = jax.nn.sigmoid(jnp.asarray(params["bias_i"], jnp.float32))
    inv_std = 1.0 / jnp.asarray(c_std, jnp.float32)

    P = jnp.zeros((8, _P_WIDTH), jnp.float32)
    P = P.at[0, _W1_OFF:_W1_OFF + go].set(w1o)
    P = P.at[1, _W1_OFF:_W1_OFF + gl].set(w1l)
    P = P.at[0, _B1_OFF:_B1_OFF + go].set(b1o)
    P = P.at[1, _B1_OFF:_B1_OFF + gl].set(b1l)
    # W2 / b2 pre-scaled by 0.5 so the in-kernel sigmoid is a single tanh.
    P = P.at[0, _W2_OFF:_W2_OFF + go].set(0.5 * w2o)
    P = P.at[1, _W2_OFF:_W2_OFF + gl].set(0.5 * w2l)
    P = P.at[0, _B2_LANE].set(0.5 * jnp.asarray(params["b2_o"], jnp.float32))
    P = P.at[1, _B2_LANE].set(0.5 * jnp.asarray(params["b2_l"], jnp.float32))
    P = P.at[0, _SC_LANE].set(jnp.asarray(c_mean, jnp.float32))
    P = P.at[1, _SC_LANE].set(inv_std)
    P = P.at[2, _SC_LANE].set(i_gate)
    P = P.at[3, _SC_LANE].set(1.0 - i_gate)
    P = P.at[4, _SC_LANE].set(jnp.asarray(params["c0"], jnp.float32))
    return P, i_gate


@jax.jit
def mcpbrnn_cell_forward(x_d, params, c_mean, c_std):
    """Runs the MCPBRNN_Generic_OutputANNGate_PETconstraint recurrence on TPU."""
    T = x_d.shape[0]
    chunk = min(1024, _round_up(T, 8))      # time steps per grid point
    T_pad = _round_up(T, chunk)
    n_chunks = T_pad // chunk

    precip = x_d[:, 0:1].astype(jnp.float32)
    pet = x_d[:, 1:2].astype(jnp.float32)
    if T_pad != T:
        z = jnp.zeros((T_pad - T, 1), jnp.float32)
        precip = jnp.concatenate([precip, z], axis=0)
        pet = jnp.concatenate([pet, z], axis=0)

    P, i_gate = _pack_params(params, c_mean, c_std)

    packed = pl.pallas_call(
        _mcpbrnn_kernel,
        out_shape=jax.ShapeDtypeStruct((T_pad, LANES), jnp.float32),
        grid=(n_chunks,),
        in_specs=[
            pl.BlockSpec((chunk, 1), lambda i: (i, 0)),          # precip
            pl.BlockSpec((chunk, 1), lambda i: (i, 0)),          # PET
            pl.BlockSpec((8, _P_WIDTH), lambda i: (0, 0)),       # packed params
        ],
        out_specs=pl.BlockSpec((chunk, LANES), lambda i: (i, 0)),
        scratch_shapes=[pltpu.VMEM((1, 1), jnp.float32)],        # carried storage c
        compiler_params=pltpu.CompilerParams(
            dimension_semantics=("arbitrary",),                  # sequential scan
            vmem_limit_bytes=16 * 1024 * 1024,
        ),
    )(precip, pet, P)

    packed = packed[:T, :]
    h, c, l, lc, bp, oo, ol, olc, f = (packed[:, k:k + 1] for k in range(_N_OUT))
    ig = jnp.full((T, 1), i_gate, jnp.float32)   # input gate is parameter-only
    return h, c, l, lc, bp, ig, oo, ol, olc, f


def model_forward(x_d, epoch, time_lag, y_eval, c_mean, c_std, params,
                  spin_len, traintime_len, dropout_rate=0.0):
    """JAX equivalent of Model.forward."""
    # TODO(synk): epoch / time_lag / y_eval / spinLen / traintimeLen only feed the
    # cell's training bookkeeping (h_nout, obs_std) which Model.forward discards.
    del epoch, time_lag, y_eval, spin_len, traintime_len, dropout_rate
    h, c, l, lc, bp, ig, oo, ol, olc, f = mcpbrnn_cell_forward(
        x_d, params, c_mean, c_std)
    out = h          # Dropout(p=0.0) -> identity
    return (out, h, c, l, lc, bp, ig, oo, ol, olc, f)


# -----------------------------------------------------------------------------
# Pure-JAX reference (lax.scan) for correctness checking.
# -----------------------------------------------------------------------------
def reference_cell(x_d, params, c_mean, c_std):
    precip = x_d[:, 0].astype(jnp.float32)
    pet = x_d[:, 1].astype(jnp.float32)
    w1o = jnp.asarray(params["w1_o"], jnp.float32).reshape(-1)
    b1o = jnp.asarray(params["b1_o"], jnp.float32).reshape(-1)
    w2o = jnp.asarray(params["w2_o"], jnp.float32).reshape(-1)
    b2o = jnp.asarray(params["b2_o"], jnp.float32)
    w1l = jnp.asarray(params["w1_l"], jnp.float32).reshape(-1)
    b1l = jnp.asarray(params["b1_l"], jnp.float32).reshape(-1)
    w2l = jnp.asarray(params["w2_l"], jnp.float32).reshape(-1)
    b2l = jnp.asarray(params["b2_l"], jnp.float32)
    i_gate = jax.nn.sigmoid(jnp.asarray(params["bias_i"], jnp.float32))
    c_mean = jnp.asarray(c_mean, jnp.float32)
    inv_std = 1.0 / jnp.asarray(c_std, jnp.float32)

    def sigmoid(v):
        return 0.5 * jnp.tanh(0.5 * v) + 0.5

    def step(c_prev, inp):
        x_t, pet_t = inp
        cn = (c_prev - c_mean) * inv_std
        oo = sigmoid(jnp.sum(w2o * jnp.tanh(w1o * cn + b1o)) + b2o)
        ol = sigmoid(jnp.sum(w2l * jnp.tanh(w1l * cn + b1l)) + b2l)
        l_t = ol * c_prev
        lc_t = jnp.minimum(l_t, pet_t)
        olc = lc_t / (c_prev + EPS)
        f_t = 1.0 - oo - olc
        h_t = oo * c_prev
        bp_t = (1.0 - i_gate) * x_t
        c_new = f_t * c_prev + i_gate * x_t
        return c_new, (h_t, c_new, l_t, lc_t, bp_t, i_gate, oo, ol, olc, f_t)

    c0 = jnp.asarray(params["c0"], jnp.float32)
    _, ys = lax.scan(step, c0, (precip, pet))
    return tuple(y.reshape(-1, 1) for y in ys)


# -----------------------------------------------------------------------------
# Deterministic parameter construction (shapes implied by __init__ / cfg).
# -----------------------------------------------------------------------------
def init_params(key, gate_dim_o, gate_dim_l):
    ks = jax.random.split(key, 8)
    return {
        "w1_o": 0.5 * jax.random.normal(ks[0], (gate_dim_o, 1), jnp.float32),
        "b1_o": 0.1 * jax.random.normal(ks[1], (gate_dim_o,), jnp.float32),
        "w2_o": 0.5 * jax.random.normal(ks[2], (1, gate_dim_o), jnp.float32),
        "b2_o": jnp.float32(-1.0),
        "w1_l": 0.5 * jax.random.normal(ks[3], (gate_dim_l, 1), jnp.float32),
        "b1_l": 0.1 * jax.random.normal(ks[4], (gate_dim_l,), jnp.float32),
        "w2_l": 0.5 * jax.random.normal(ks[5], (1, gate_dim_l), jnp.float32),
        "b2_l": jnp.float32(-1.5),
        "bias_i": jnp.float32(2.0),   # initial_forget_bias-style init: i ~ 0.88
        "c0": jnp.float32(0.0),       # initial storage
    }


if __name__ == "__main__":
    key = jax.random.PRNGKey(0)
    k_x, k_pet, k_y, k_p = jax.random.split(key, 4)

    # Small shapes consistent with the module (hidden_size=1, input_size_dyn=1).
    T = 64                    # sequence length (timeLen is 15705 in the script)
    gate_dim_o = 8
    gate_dim_l = 8
    spin_len = 8
    traintime_len = 48
    c_mean = jnp.float32(0.5)
    c_std = jnp.float32(1.0)
    time_lag = 0
    epoch = 0

    precip = jax.random.uniform(k_x, (T, 1), jnp.float32, 0.0, 2.0)   # inflow forcing
    pet = jax.random.uniform(k_pet, (T, 1), jnp.float32, 0.0, 0.5)    # PET constraint forcing
    x_d = jnp.concatenate([precip, pet], axis=1)                      # [T, 2]
    y_eval = jax.random.uniform(k_y, (T, 1), jnp.float32, 0.0, 1.0)   # observations

    params = init_params(k_p, gate_dim_o, gate_dim_l)

    outs = model_forward(x_d, epoch, time_lag, y_eval, c_mean, c_std, params,
                         spin_len, traintime_len)
    outs = jax.block_until_ready(outs)

    # Verify against the pure-JAX reference.
    ref = reference_cell(x_d, params, c_mean, c_std)
    kernel_tuple = outs[1:]   # (h, c, l, lc, bp, i, oo, ol, olc, f)
    names = ["h", "c", "l", "lc", "bp", "i", "oo", "ol", "olc", "f"]
    for name, a, b in zip(names, kernel_tuple, ref):
        assert a.shape == (T, 1), (name, a.shape)
        assert jnp.all(jnp.isfinite(a)), name
        if not jnp.allclose(a, b, rtol=2e-3, atol=2e-3):
            raise AssertionError(f"mismatch in {name}")

    print("KERNEL_OK")
</pallas_src>

<mosaic_0001>
module attributes {stable_mosaic.version = 11 : i64} {
  func.func @_mcpbrnn_kernel(%arg0: i32, %arg1: memref<64x1xf32, #tpu.memory_space<vmem>>, %arg2: memref<64x1xf32, #tpu.memory_space<vmem>>, %arg3: memref<8x512xf32, #tpu.memory_space<vmem>>, %arg4: memref<64x128xf32, #tpu.memory_space<vmem>>, %arg5: memref<1x1xf32, #tpu.memory_space<vmem>>) attributes {dimension_semantics = [#tpu.dimension_semantics<arbitrary>], iteration_bounds = array<i64: 1>, scalar_prefetch = 0 : i64, scratch_operands = 1 : i64, tpu.core_type = #tpu.core_type<tc>, window_params = [{transform_indices = @transform_0, window_bounds = array<i64: 64, 1>}, {transform_indices = @transform_1, window_bounds = array<i64: 64, 1>}, {pipeline_mode = #tpu.pipeline_mode<synchronous>, transform_indices = @transform_2, window_bounds = array<i64: 8, 512>}, {transform_indices = @transform_3, window_bounds = array<i64: 64, 128>}]} {
    %c0 = arith.constant 0 : index
    %c0_0 = arith.constant 0 : index
    %0 = vector.load %arg3[%c0, %c0_0] : memref<8x512xf32, #tpu.memory_space<vmem>>, vector<8x128xf32>
    %c0_1 = arith.constant 0 : index
    %c128 = arith.constant 128 : index
    %1 = vector.load %arg3[%c0_1, %c128] : memref<8x512xf32, #tpu.memory_space<vmem>>, vector<8x128xf32>
    %c0_2 = arith.constant 0 : index
    %c256 = arith.constant 256 : index
    %2 = vector.load %arg3[%c0_2, %c256] : memref<8x512xf32, #tpu.memory_space<vmem>>, vector<8x128xf32>
    %c0_3 = arith.constant 0 : index
    %c384 = arith.constant 384 : index
    %3 = vector.load %arg3[%c0_3, %c384] : memref<8x512xf32, #tpu.memory_space<vmem>>, vector<8x1xf32>
    %c0_4 = arith.constant 0 : index
    %c385 = arith.constant 385 : index
    %4 = vector.load %arg3[%c0_4, %c385] : memref<8x512xf32, #tpu.memory_space<vmem>>, vector<8x1xf32>
    %5 = vector.extract_strided_slice %4 {offsets = [0, 0], sizes = [1, 1], strides = [1, 1]} : vector<8x1xf32> to vector<1x1xf32>
    %6 = vector.extract_strided_slice %4 {offsets = [1, 0], sizes = [1, 1], strides = [1, 1]} : vector<8x1xf32> to vector<1x1xf32>
    %7 = vector.extract_strided_slice %4 {offsets = [2, 0], sizes = [1, 1], strides = [1, 1]} : vector<8x1xf32> to vector<1x1xf32>
    %8 = vector.extract_strided_slice %4 {offsets = [3, 0], sizes = [1, 1], strides = [1, 1]} : vector<8x1xf32> to vector<1x1xf32>
    %9 = vector.extract_strided_slice %4 {offsets = [4, 0], sizes = [1, 1], strides = [1, 1]} : vector<8x1xf32> to vector<1x1xf32>
    %c0_i32 = arith.constant 0 : i32
    %10 = arith.cmpi eq, %arg0, %c0_i32 : i32
    %11 = arith.extui %10 : i1 to i32
    %c0_i32_5 = arith.constant 0 : i32
    %12 = arith.cmpi ne, %11, %c0_i32_5 : i32
    scf.if %12 {
      %c0_15 = arith.constant 0 : index
      %c0_16 = arith.constant 0 : index
      %54 = vector.load %arg5[%c0_15, %c0_16] : memref<1x1xf32, #tpu.memory_space<vmem>>, vector<1x1xf32>
      tpu.vector_store %arg5[%c0_15, %c0_16], %9 {strides = array<i32>} : memref<1x1xf32, #tpu.memory_space<vmem>>, vector<1x1xf32>,
    } else {
    }
    %13 = tpu.iota {dimensions = array<i32: 1>} : vector<1x128xi32>
    %c0_i32_6 = arith.constant 0 : i32
    %14 = vector.broadcast %c0_i32_6 : i32 to vector<1x128xi32>
    %15 = arith.cmpi eq, %13, %14 : vector<1x128xi32>
    %16 = arith.extui %15 : vector<1x128xi1> to vector<1x128xi32>
    %17 = arith.sitofp %16 : vector<1x128xi32> to vector<1x128xf32>
    %c1_i32 = arith.constant 1 : i32
    %18 = vector.broadcast %c1_i32 : i32 to vector<1x128xi32>
    %19 = arith.cmpi eq, %13, %18 : vector<1x128xi32>
    %20 = arith.extui %19 : vector<1x128xi1> to vector<1x128xi32>
    %21 = arith.sitofp %20 : vector<1x128xi32> to vector<1x128xf32>
    %c2_i32 = arith.constant 2 : i32
    %22 = vector.broadcast %c2_i32 : i32 to vector<1x128xi32>
    %23 = arith.cmpi eq, %13, %22 : vector<1x128xi32>
    %24 = arith.extui %23 : vector<1x128xi1> to vector<1x128xi32>
    %25 = arith.sitofp %24 : vector<1x128xi32> to vector<1x128xf32>
    %c3_i32 = arith.constant 3 : i32
    %26 = vector.broadcast %c3_i32 : i32 to vector<1x128xi32>
    %27 = arith.cmpi eq, %13, %26 : vector<1x128xi32>
    %28 = arith.extui %27 : vector<1x128xi1> to vector<1x128xi32>
    %29 = arith.sitofp %28 : vector<1x128xi32> to vector<1x128xf32>
    %c4_i32 = arith.constant 4 : i32
    %30 = vector.broadcast %c4_i32 : i32 to vector<1x128xi32>
    %31 = arith.cmpi eq, %13, %30 : vector<1x128xi32>
    %32 = arith.extui %31 : vector<1x128xi1> to vector<1x128xi32>
    %33 = arith.sitofp %32 : vector<1x128xi32> to vector<1x128xf32>
    %c5_i32 = arith.constant 5 : i32
    %34 = vector.broadcast %c5_i32 : i32 to vector<1x128xi32>
    %35 = arith.cmpi eq, %13, %34 : vector<1x128xi32>
    %36 = arith.extui %35 : vector<1x128xi1> to vector<1x128xi32>
    %37 = arith.sitofp %36 : vector<1x128xi32> to vector<1x128xf32>
    %c6_i32 = arith.constant 6 : i32
    %38 = vector.broadcast %c6_i32 : i32 to vector<1x128xi32>
    %39 = arith.cmpi eq, %13, %38 : vector<1x128xi32>
    %40 = arith.extui %39 : vector<1x128xi1> to vector<1x128xi32>
    %41 = arith.sitofp %40 : vector<1x128xi32> to vector<1x128xf32>
    %c7_i32 = arith.constant 7 : i32
    %42 = vector.broadcast %c7_i32 : i32 to vector<1x128xi32>
    %43 = arith.cmpi eq, %13, %42 : vector<1x128xi32>
    %44 = arith.extui %43 : vector<1x128xi1> to vector<1x128xi32>
    %45 = arith.sitofp %44 : vector<1x128xi32> to vector<1x128xf32>
    %c8_i32 = arith.constant 8 : i32
    %46 = vector.broadcast %c8_i32 : i32 to vector<1x128xi32>
    %47 = arith.cmpi eq, %13, %46 : vector<1x128xi32>
    %48 = arith.extui %47 : vector<1x128xi1> to vector<1x128xi32>
    %49 = arith.sitofp %48 : vector<1x128xi32> to vector<1x128xf32>
    %c0_7 = arith.constant 0 : index
    %c0_8 = arith.constant 0 : index
    %50 = vector.load %arg5[%c0_7, %c0_8] : memref<1x1xf32, #tpu.memory_space<vmem>>, vector<1x1xf32>
    %c0_i32_9 = arith.constant 0 : i32
    %c8_i32_10 = arith.constant 8 : i32
    %51 = arith.addi %c0_i32_9, %c8_i32_10 : i32
    %c1_i32_11 = arith.constant 1 : i32
    %52 = scf.for %arg6 = %c0_i32_9 to %51 step %c1_i32_11 iter_args(%arg7 = %50) -> (vector<1x1xf32>)  : i32 {
      %c8_i32_15 = arith.constant 8 : i32
      %54 = arith.muli %arg6, %c8_i32_15 : i32
      %55 = tpu.assume_multiple %54, 8 : i32
      %c0_i32_16 = arith.constant 0 : i32
      %56 = arith.addi %55, %c0_i32_16 : i32
      %57 = arith.index_cast %56 : i32 to index
      %c0_17 = arith.constant 0 : index
      %58 = vector.load %arg1[%57, %c0_17] : memref<64x1xf32, #tpu.memory_space<vmem>>, vector<1x1xf32>
      %59 = arith.index_cast %56 : i32 to index
      %c0_18 = arith.constant 0 : index
      %60 = vector.load %arg2[%59, %c0_18] : memref<64x1xf32, #tpu.memory_space<vmem>>, vector<1x1xf32>
      %cst = arith.constant 9.99999997E-7 : f32
      %61 = vector.broadcast %cst : f32 to vector<1x1xf32>
      %62 = arith.addf %arg7, %61 : vector<1x1xf32>
      %cst_19 = arith.constant 1.000000e+00 : f32
      %63 = vector.broadcast %cst_19 : f32 to vector<1x1xf32>
      %64 = arith.divf %63, %62 : vector<1x1xf32>
      %65 = arith.subf %arg7, %5 : vector<1x1xf32>
      %66 = arith.mulf %65, %6 : vector<1x1xf32>
      %67 = vector.broadcast %66 : vector<1x1xf32> to vector<8x128xf32>
      %68 = arith.mulf %0, %67 : vector<8x128xf32>
      %69 = arith.addf %68, %1 : vector<8x128xf32>
      %70 = math.tanh %69 : vector<8x128xf32>
      %71 = arith.mulf %2, %70 : vector<8x128xf32>
      %cst_20 = arith.constant dense<0.000000e+00> : vector<8xf32>
      %72 = vector.multi_reduction <add>, %71, %cst_20 [1] : vector<8x128xf32> to vector<8xf32>
      %73 = vector.shape_cast %72 : vector<8xf32> to vector<8x1xf32>
      %74 = arith.addf %73, %3 : vector<8x1xf32>
      %75 = math.tanh %74 : vector<8x1xf32>
      %cst_21 = arith.constant 5.000000e-01 : f32
      %76 = vector.broadcast %cst_21 : f32 to vector<8x1xf32>
      %77 = arith.mulf %76, %75 : vector<8x1xf32>
      %cst_22 = arith.constant 5.000000e-01 : f32
      %78 = vector.broadcast %cst_22 : f32 to vector<8x1xf32>
      %79 = arith.addf %77, %78 : vector<8x1xf32>
      %80 = vector.extract_strided_slice %79 {offsets = [0, 0], sizes = [1, 1], strides = [1, 1]} : vector<8x1xf32> to vector<1x1xf32>
      %81 = vector.extract_strided_slice %79 {offsets = [1, 0], sizes = [1, 1], strides = [1, 1]} : vector<8x1xf32> to vector<1x1xf32>
      %82 = arith.mulf %81, %arg7 : vector<1x1xf32>
      %83 = arith.minimumf %82, %60 : vector<1x1xf32>
      %84 = arith.mulf %83, %64 : vector<1x1xf32>
      %cst_23 = arith.constant 1.000000e+00 : f32
      %85 = vector.broadcast %cst_23 : f32 to vector<1x1xf32>
      %86 = arith.subf %85, %80 : vector<1x1xf32>
      %87 = arith.subf %86, %84 : vector<1x1xf32>
      %88 = arith.mulf %80, %arg7 : vector<1x1xf32>
      %89 = arith.mulf %8, %58 : vector<1x1xf32>
      %90 = arith.mulf %87, %arg7 : vector<1x1xf32>
      %91 = arith.mulf %7, %58 : vector<1x1xf32>
      %92 = arith.addf %90, %91 : vector<1x1xf32>
      %93 = vector.broadcast %88 : vector<1x1xf32> to vector<1x128xf32>
      %94 = arith.mulf %93, %17 : vector<1x128xf32>
      %95 = vector.broadcast %92 : vector<1x1xf32> to vector<1x128xf32>
      %96 = arith.mulf %95, %21 : vector<1x128xf32>
      %97 = arith.addf %94, %96 : vector<1x128xf32>
      %98 = vector.broadcast %82 : vector<1x1xf32> to vector<1x128xf32>
      %99 = arith.mulf %98, %25 : vector<1x128xf32>
      %100 = arith.addf %97, %99 : vector<1x128xf32>
      %101 = vector.broadcast %83 : vector<1x1xf32> to vector<1x128xf32>
      %102 = arith.mulf %101, %29 : vector<1x128xf32>
      %103 = arith.addf %100, %102 : vector<1x128xf32>
      %104 = vector.broadcast %89 : vector<1x1xf32> to vector<1x128xf32>
      %105 = arith.mulf %104, %33 : vector<1x128xf32>
      %106 = arith.addf %103, %105 : vector<1x128xf32>
      %107 = vector.broadcast %80 : vector<1x1xf32> to vector<1x128xf32>
      %108 = arith.mulf %107, %37 : vector<1x128xf32>
      %109 = arith.addf %106, %108 : vector<1x128xf32>
      %110 = vector.broadcast %81 : vector<1x1xf32> to vector<1x128xf32>
      %111 = arith.mulf %110, %41 : vector<1x128xf32>
      %112 = arith.addf %109, %111 : vector<1x128xf32>
      %113 = vector.broadcast %84 : vector<1x1xf32> to vector<1x128xf32>
      %114 = arith.mulf %113, %45 : vector<1x128xf32>
      %115 = arith.addf %112, %114 : vector<1x128xf32>
      %116 = vector.broadcast %87 : vector<1x1xf32> to vector<1x128xf32>
      %117 = arith.mulf %116, %49 : vector<1x128xf32>
      %118 = arith.addf %115, %117 : vector<1x128xf32>
      %119 = arith.index_cast %56 : i32 to index
      %c0_24 = arith.constant 0 : index
      %120 = vector.load %arg4[%119, %c0_24] : memref<64x128xf32, #tpu.memory_space<vmem>>, vector<1x128xf32>
      tpu.vector_store %arg4[%119, %c0_24], %118 {strides = array<i32>} : memref<64x128xf32, #tpu.memory_space<vmem>>, vector<1x128xf32>,
      %c1_i32_25 = arith.constant 1 : i32
      %121 = arith.addi %55, %c1_i32_25 : i32
      %122 = arith.index_cast %121 : i32 to index
      %c0_26 = arith.constant 0 : index
      %123 = vector.load %arg1[%122, %c0_26] : memref<64x1xf32, #tpu.memory_space<vmem>>, vector<1x1xf32>
      %124 = arith.index_cast %121 : i32 to index
      %c0_27 = arith.constant 0 : index
      %125 = vector.load %arg2[%124, %c0_27] : memref<64x1xf32, #tpu.memory_space<vmem>>, vector<1x1xf32>
      %cst_28 = arith.constant 9.99999997E-7 : f32
      %126 = vector.broadcast %cst_28 : f32 to vector<1x1xf32>
      %127 = arith.addf %92, %126 : vector<1x1xf32>
      %cst_29 = arith.constant 1.000000e+00 : f32
      %128 = vector.broadcast %cst_29 : f32 to vector<1x1xf32>
      %129 = arith.divf %128, %127 : vector<1x1xf32>
      %130 = arith.subf %92, %5 : vector<1x1xf32>
      %131 = arith.mulf %130, %6 : vector<1x1xf32>
      %132 = vector.broadcast %131 : vector<1x1xf32> to vector<8x128xf32>
      %133 = arith.mulf %0, %132 : vector<8x128xf32>
      %134 = arith.addf %133, %1 : vector<8x128xf32>
      %135 = math.tanh %134 : vector<8x128xf32>
      %136 = arith.mulf %2, %135 : vector<8x128xf32>
      %cst_30 = arith.constant dense<0.000000e+00> : vector<8xf32>
      %137 = vector.multi_reduction <add>, %136, %cst_30 [1] : vector<8x128xf32> to vector<8xf32>
      %138 = vector.shape_cast %137 : vector<8xf32> to vector<8x1xf32>
      %139 = arith.addf %138, %3 : vector<8x1xf32>
      %140 = math.tanh %139 : vector<8x1xf32>
      %cst_31 = arith.constant 5.000000e-01 : f32
      %141 = vector.broadcast %cst_31 : f32 to vector<8x1xf32>
      %142 = arith.mulf %141, %140 : vector<8x1xf32>
      %cst_32 = arith.constant 5.000000e-01 : f32
      %143 = vector.broadcast %cst_32 : f32 to vector<8x1xf32>
      %144 = arith.addf %142, %143 : vector<8x1xf32>
      %145 = vector.extract_strided_slice %144 {offsets = [0, 0], sizes = [1, 1], strides = [1, 1]} : vector<8x1xf32> to vector<1x1xf32>
      %146 = vector.extract_strided_slice %144 {offsets = [1, 0], sizes = [1, 1], strides = [1, 1]} : vector<8x1xf32> to vector<1x1xf32>
      %147 = arith.mulf %146, %92 : vector<1x1xf32>
      %148 = arith.minimumf %147, %125 : vector<1x1xf32>
      %149 = arith.mulf %148, %129 : vector<1x1xf32>
      %cst_33 = arith.constant 1.000000e+00 : f32
      %150 = vector.broadcast %cst_33 : f32 to vector<1x1xf32>
      %151 = arith.subf %150, %145 : vector<1x1xf32>
      %152 = arith.subf %151, %149 : vector<1x1xf32>
      %153 = arith.mulf %145, %92 : vector<1x1xf32>
      %154 = arith.mulf %8, %123 : vector<1x1xf32>
      %155 = arith.mulf %152, %92 : vector<1x1xf32>
      %156 = arith.mulf %7, %123 : vector<1x1xf32>
      %157 = arith.addf %155, %156 : vector<1x1xf32>
      %158 = vector.broadcast %153 : vector<1x1xf32> to vector<1x128xf32>
      %159 = arith.mulf %158, %17 : vector<1x128xf32>
      %160 = vector.broadcast %157 : vector<1x1xf32> to vector<1x128xf32>
      %161 = arith.mulf %160, %21 : vector<1x128xf32>
      %162 = arith.addf %159, %161 : vector<1x128xf32>
      %163 = vector.broadcast %147 : vector<1x1xf32> to vector<1x128xf32>
      %164 = arith.mulf %163, %25 : vector<1x128xf32>
      %165 = arith.addf %162, %164 : vector<1x128xf32>
      %166 = vector.broadcast %148 : vector<1x1xf32> to vector<1x128xf32>
      %167 = arith.mulf %166, %29 : vector<1x128xf32>
      %168 = arith.addf %165, %167 : vector<1x128xf32>
      %169 = vector.broadcast %154 : vector<1x1xf32> to vector<1x128xf32>
      %170 = arith.mulf %169, %33 : vector<1x128xf32>
      %171 = arith.addf %168, %170 : vector<1x128xf32>
      %172 = vector.broadcast %145 : vector<1x1xf32> to vector<1x128xf32>
      %173 = arith.mulf %172, %37 : vector<1x128xf32>
      %174 = arith.addf %171, %173 : vector<1x128xf32>
      %175 = vector.broadcast %146 : vector<1x1xf32> to vector<1x128xf32>
      %176 = arith.mulf %175, %41 : vector<1x128xf32>
      %177 = arith.addf %174, %176 : vector<1x128xf32>
      %178 = vector.broadcast %149 : vector<1x1xf32> to vector<1x128xf32>
      %179 = arith.mulf %178, %45 : vector<1x128xf32>
      %180 = arith.addf %177, %179 : vector<1x128xf32>
      %181 = vector.broadcast %152 : vector<1x1xf32> to vector<1x128xf32>
      %182 = arith.mulf %181, %49 : vector<1x128xf32>
      %183 = arith.addf %180, %182 : vector<1x128xf32>
      %184 = arith.index_cast %121 : i32 to index
      %c0_34 = arith.constant 0 : index
      %185 = vector.load %arg4[%184, %c0_34] : memref<64x128xf32, #tpu.memory_space<vmem>>, vector<1x128xf32>
      tpu.vector_store %arg4[%184, %c0_34], %183 {strides = array<i32>} : memref<64x128xf32, #tpu.memory_space<vmem>>, vector<1x128xf32>,
      %c2_i32_35 = arith.constant 2 : i32
      %186 = arith.addi %55, %c2_i32_35 : i32
      %187 = arith.index_cast %186 : i32 to index
      %c0_36 = arith.constant 0 : index
      %188 = vector.load %arg1[%187, %c0_36] : memref<64x1xf32, #tpu.memory_space<vmem>>, vector<1x1xf32>
      %189 = arith.index_cast %186 : i32 to index
      %c0_37 = arith.constant 0 : index
      %190 = vector.load %arg2[%189, %c0_37] : memref<64x1xf32, #tpu.memory_space<vmem>>, vector<1x1xf32>
      %cst_38 = arith.constant 9.99999997E-7 : f32
      %191 = vector.broadcast %cst_38 : f32 to vector<1x1xf32>
      %192 = arith.addf %157, %191 : vector<1x1xf32>
      %cst_39 = arith.constant 1.000000e+00 : f32
      %193 = vector.broadcast %cst_39 : f32 to vector<1x1xf32>
      %194 = arith.divf %193, %192 : vector<1x1xf32>
      %195 = arith.subf %157, %5 : vector<1x1xf32>
      %196 = arith.mulf %195, %6 : vector<1x1xf32>
      %197 = vector.broadcast %196 : vector<1x1xf32> to vector<8x128xf32>
      %198 = arith.mulf %0, %197 : vector<8x128xf32>
      %199 = arith.addf %198, %1 : vector<8x128xf32>
      %200 = math.tanh %199 : vector<8x128xf32>
      %201 = arith.mulf %2, %200 : vector<8x128xf32>
      %cst_40 = arith.constant dense<0.000000e+00> : vector<8xf32>
      %202 = vector.multi_reduction <add>, %201, %cst_40 [1] : vector<8x128xf32> to vector<8xf32>
      %203 = vector.shape_cast %202 : vector<8xf32> to vector<8x1xf32>
      %204 = arith.addf %203, %3 : vector<8x1xf32>
      %205 = math.tanh %204 : vector<8x1xf32>
      %cst_41 = arith.constant 5.000000e-01 : f32
      %206 = vector.broadcast %cst_41 : f32 to vector<8x1xf32>
      %207 = arith.mulf %206, %205 : vector<8x1xf32>
      %cst_42 = arith.constant 5.000000e-01 : f32
      %208 = vector.broadcast %cst_42 : f32 to vector<8x1xf32>
      %209 = arith.addf %207, %208 : vector<8x1xf32>
      %210 = vector.extract_strided_slice %209 {offsets = [0, 0], sizes = [1, 1], strides = [1, 1]} : vector<8x1xf32> to vector<1x1xf32>
      %211 = vector.extract_strided_slice %209 {offsets = [1, 0], sizes = [1, 1], strides = [1, 1]} : vector<8x1xf32> to vector<1x1xf32>
      %212 = arith.mulf %211, %157 : vector<1x1xf32>
      %213 = arith.minimumf %212, %190 : vector<1x1xf32>
      %214 = arith.mulf %213, %194 : vector<1x1xf32>
      %cst_43 = arith.constant 1.000000e+00 : f32
      %215 = vector.broadcast %cst_43 : f32 to vector<1x1xf32>
      %216 = arith.subf %215, %210 : vector<1x1xf32>
      %217 = arith.subf %216, %214 : vector<1x1xf32>
      %218 = arith.mulf %210, %157 : vector<1x1xf32>
      %219 = arith.mulf %8, %188 : vector<1x1xf32>
      %220 = arith.mulf %217, %157 : vector<1x1xf32>
      %221 = arith.mulf %7, %188 : vector<1x1xf32>
      %222 = arith.addf %220, %221 : vector<1x1xf32>
      %223 = vector.broadcast %218 : vector<1x1xf32> to vector<1x128xf32>
      %224 = arith.mulf %223, %17 : vector<1x128xf32>
      %225 = vector.broadcast %222 : vector<1x1xf32> to vector<1x128xf32>
      %226 = arith.mulf %225, %21 : vector<1x128xf32>
      %227 = arith.addf %224, %226 : vector<1x128xf32>
      %228 = vector.broadcast %212 : vector<1x1xf32> to vector<1x128xf32>
      %229 = arith.mulf %228, %25 : vector<1x128xf32>
      %230 = arith.addf %227, %229 : vector<1x128xf32>
      %231 = vector.broadcast %213 : vector<1x1xf32> to vector<1x128xf32>
      %232 = arith.mulf %231, %29 : vector<1x128xf32>
      %233 = arith.addf %230, %232 : vector<1x128xf32>
      %234 = vector.broadcast %219 : vector<1x1xf32> to vector<1x128xf32>
      %235 = arith.mulf %234, %33 : vector<1x128xf32>
      %236 = arith.addf %233, %235 : vector<1x128xf32>
      %237 = vector.broadcast %210 : vector<1x1xf32> to vector<1x128xf32>
      %238 = arith.mulf %237, %37 : vector<1x128xf32>
      %239 = arith.addf %236, %238 : vector<1x128xf32>
      %240 = vector.broadcast %211 : vector<1x1xf32> to vector<1x128xf32>
      %241 = arith.mulf %240, %41 : vector<1x128xf32>
      %242 = arith.addf %239, %241 : vector<1x128xf32>
      %243 = vector.broadcast %214 : vector<1x1xf32> to vector<1x128xf32>
      %244 = arith.mulf %243, %45 : vector<1x128xf32>
      %245 = arith.addf %242, %244 : vector<1x128xf32>
      %246 = vector.broadcast %217 : vector<1x1xf32> to vector<1x128xf32>
      %247 = arith.mulf %246, %49 : vector<1x128xf32>
      %248 = arith.addf %245, %247 : vector<1x128xf32>
      %249 = arith.index_cast %186 : i32 to index
      %c0_44 = arith.constant 0 : index
      %250 = vector.load %arg4[%249, %c0_44] : memref<64x128xf32, #tpu.memory_space<vmem>>, vector<1x128xf32>
      tpu.vector_store %arg4[%249, %c0_44], %248 {strides = array<i32>} : memref<64x128xf32, #tpu.memory_space<vmem>>, vector<1x128xf32>,
      %c3_i32_45 = arith.constant 3 : i32
      %251 = arith.addi %55, %c3_i32_45 : i32
      %252 = arith.index_cast %251 : i32 to index
      %c0_46 = arith.constant 0 : index
      %253 = vector.load %arg1[%252, %c0_46] : memref<64x1xf32, #tpu.memory_space<vmem>>, vector<1x1xf32>
      %254 = arith.index_cast %251 : i32 to index
      %c0_47 = arith.constant 0 : index
      %255 = vector.load %arg2[%254, %c0_47] : memref<64x1xf32, #tpu.memory_space<vmem>>, vector<1x1xf32>
      %cst_48 = arith.constant 9.99999997E-7 : f32
      %256 = vector.broadcast %cst_48 : f32 to vector<1x1xf32>
      %257 = arith.addf %222, %256 : vector<1x1xf32>
      %cst_49 = arith.constant 1.000000e+00 : f32
      %258 = vector.broadcast %cst_49 : f32 to vector<1x1xf32>
      %259 = arith.divf %258, %257 : vector<1x1xf32>
      %260 = arith.subf %222, %5 : vector<1x1xf32>
      %261 = arith.mulf %260, %6 : vector<1x1xf32>
      %262 = vector.broadcast %261 : vector<1x1xf32> to vector<8x128xf32>
      %263 = arith.mulf %0, %262 : vector<8x128xf32>
      %264 = arith.addf %263, %1 : vector<8x128xf32>
      %265 = math.tanh %264 : vector<8x128xf32>
      %266 = arith.mulf %2, %265 : vector<8x128xf32>
      %cst_50 = arith.constant dense<0.000000e+00> : vector<8xf32>
      %267 = vector.multi_reduction <add>, %266, %cst_50 [1] : vector<8x128xf32> to vector<8xf32>
      %268 = vector.shape_cast %267 : vector<8xf32> to vector<8x1xf32>
      %269 = arith.addf %268, %3 : vector<8x1xf32>
      %270 = math.tanh %269 : vector<8x1xf32>
      %cst_51 = arith.constant 5.000000e-01 : f32
      %271 = vector.broadcast %cst_51 : f32 to vector<8x1xf32>
      %272 = arith.mulf %271, %270 : vector<8x1xf32>
      %cst_52 = arith.constant 5.000000e-01 : f32
      %273 = vector.broadcast %cst_52 : f32 to vector<8x1xf32>
      %274 = arith.addf %272, %273 : vector<8x1xf32>
      %275 = vector.extract_strided_slice %274 {offsets = [0, 0], sizes = [1, 1], strides = [1, 1]} : vector<8x1xf32> to vector<1x1xf32>
      %276 = vector.extract_strided_slice %274 {offsets = [1, 0], sizes = [1, 1], strides = [1, 1]} : vector<8x1xf32> to vector<1x1xf32>
      %277 = arith.mulf %276, %222 : vector<1x1xf32>
      %278 = arith.minimumf %277, %255 : vector<1x1xf32>
      %279 = arith.mulf %278, %259 : vector<1x1xf32>
      %cst_53 = arith.constant 1.000000e+00 : f32
      %280 = vector.broadcast %cst_53 : f32 to vector<1x1xf32>
      %281 = arith.subf %280, %275 : vector<1x1xf32>
      %282 = arith.subf %281, %279 : vector<1x1xf32>
      %283 = arith.mulf %275, %222 : vector<1x1xf32>
      %284 = arith.mulf %8, %253 : vector<1x1xf32>
      %285 = arith.mulf %282, %222 : vector<1x1xf32>
      %286 = arith.mulf %7, %253 : vector<1x1xf32>
      %287 = arith.addf %285, %286 : vector<1x1xf32>
      %288 = vector.broadcast %283 : vector<1x1xf32> to vector<1x128xf32>
      %289 = arith.mulf %288, %17 : vector<1x128xf32>
      %290 = vector.broadcast %287 : vector<1x1xf32> to vector<1x128xf32>
      %291 = arith.mulf %290, %21 : vector<1x128xf32>
      %292 = arith.addf %289, %291 : vector<1x128xf32>
      %293 = vector.broadcast %277 : vector<1x1xf32> to vector<1x128xf32>
      %294 = arith.mulf %293, %25 : vector<1x128xf32>
      %295 = arith.addf %292, %294 : vector<1x128xf32>
      %296 = vector.broadcast %278 : vector<1x1xf32> to vector<1x128xf32>
      %297 = arith.mulf %296, %29 : vector<1x128xf32>
      %298 = arith.addf %295, %297 : vector<1x128xf32>
      %299 = vector.broadcast %284 : vector<1x1xf32> to vector<1x128xf32>
      %300 = arith.mulf %299, %33 : vector<1x128xf32>
      %301 = arith.addf %298, %300 : vector<1x128xf32>
      %302 = vector.broadcast %275 : vector<1x1xf32> to vector<1x128xf32>
      %303 = arith.mulf %302, %37 : vector<1x128xf32>
      %304 = arith.addf %301, %303 : vector<1x128xf32>
      %305 = vector.broadcast %276 : vector<1x1xf32> to vector<1x128xf32>
      %306 = arith.mulf %305, %41 : vector<1x128xf32>
      %307 = arith.addf %304, %306 : vector<1x128xf32>
      %308 = vector.broadcast %279 : vector<1x1xf32> to vector<1x128xf32>
      %309 = arith.mulf %308, %45 : vector<1x128xf32>
      %310 = arith.addf %307, %309 : vector<1x128xf32>
      %311 = vector.broadcast %282 : vector<1x1xf32> to vector<1x128xf32>
      %312 = arith.mulf %311, %49 : vector<1x128xf32>
      %313 = arith.addf %310, %312 : vector<1x128xf32>
      %314 = arith.index_cast %251 : i32 to index
      %c0_54 = arith.constant 0 : index
      %315 = vector.load %arg4[%314, %c0_54] : memref<64x128xf32, #tpu.memory_space<vmem>>, vector<1x128xf32>
      tpu.vector_store %arg4[%314, %c0_54], %313 {strides = array<i32>} : memref<64x128xf32, #tpu.memory_space<vmem>>, vector<1x128xf32>,
      %c4_i32_55 = arith.constant 4 : i32
      %316 = arith.addi %55, %c4_i32_55 : i32
      %317 = arith.index_cast %316 : i32 to index
      %c0_56 = arith.constant 0 : index
      %318 = vector.load %arg1[%317, %c0_56] : memref<64x1xf32, #tpu.memory_space<vmem>>, vector<1x1xf32>
      %319 = arith.index_cast %316 : i32 to index
      %c0_57 = arith.constant 0 : index
      %320 = vector.load %arg2[%319, %c0_57] : memref<64x1xf32, #tpu.memory_space<vmem>>, vector<1x1xf32>
      %cst_58 = arith.constant 9.99999997E-7 : f32
      %321 = vector.broadcast %cst_58 : f32 to vector<1x1xf32>
      %322 = arith.addf %287, %321 : vector<1x1xf32>
      %cst_59 = arith.constant 1.000000e+00 : f32
      %323 = vector.broadcast %cst_59 : f32 to vector<1x1xf32>
      %324 = arith.divf %323, %322 : vector<1x1xf32>
      %325 = arith.subf %287, %5 : vector<1x1xf32>
      %326 = arith.mulf %325, %6 : vector<1x1xf32>
      %327 = vector.broadcast %326 : vector<1x1xf32> to vector<8x128xf32>
      %328 = arith.mulf %0, %327 : vector<8x128xf32>
      %329 = arith.addf %328, %1 : vector<8x128xf32>
      %330 = math.tanh %329 : vector<8x128xf32>
      %331 = arith.mulf %2, %330 : vector<8x128xf32>
      %cst_60 = arith.constant dense<0.000000e+00> : vector<8xf32>
      %332 = vector.multi_reduction <add>, %331, %cst_60 [1] : vector<8x128xf32> to vector<8xf32>
      %333 = vector.shape_cast %332 : vector<8xf32> to vector<8x1xf32>
      %334 = arith.addf %333, %3 : vector<8x1xf32>
      %335 = math.tanh %334 : vector<8x1xf32>
      %cst_61 = arith.constant 5.000000e-01 : f32
      %336 = vector.broadcast %cst_61 : f32 to vector<8x1xf32>
      %337 = arith.mulf %336, %335 : vector<8x1xf32>
      %cst_62 = arith.constant 5.000000e-01 : f32
      %338 = vector.broadcast %cst_62 : f32 to vector<8x1xf32>
      %339 = arith.addf %337, %338 : vector<8x1xf32>
      %340 = vector.extract_strided_slice %339 {offsets = [0, 0], sizes = [1, 1], strides = [1, 1]} : vector<8x1xf32> to vector<1x1xf32>
      %341 = vector.extract_strided_slice %339 {offsets = [1, 0], sizes = [1, 1], strides = [1, 1]} : vector<8x1xf32> to vector<1x1xf32>
      %342 = arith.mulf %341, %287 : vector<1x1xf32>
      %343 = arith.minimumf %342, %320 : vector<1x1xf32>
      %344 = arith.mulf %343, %324 : vector<1x1xf32>
      %cst_63 = arith.constant 1.000000e+00 : f32
      %345 = vector.broadcast %cst_63 : f32 to vector<1x1xf32>
      %346 = arith.subf %345, %340 : vector<1x1xf32>
      %347 = arith.subf %346, %344 : vector<1x1xf32>
      %348 = arith.mulf %340, %287 : vector<1x1xf32>
      %349 = arith.mulf %8, %318 : vector<1x1xf32>
      %350 = arith.mulf %347, %287 : vector<1x1xf32>
      %351 = arith.mulf %7, %318 : vector<1x1xf32>
      %352 = arith.addf %350, %351 : vector<1x1xf32>
      %353 = vector.broadcast %348 : vector<1x1xf32> to vector<1x128xf32>
      %354 = arith.mulf %353, %17 : vector<1x128xf32>
      %355 = vector.broadcast %352 : vector<1x1xf32> to vector<1x128xf32>
      %356 = arith.mulf %355, %21 : vector<1x128xf32>
      %357 = arith.addf %354, %356 : vector<1x128xf32>
      %358 = vector.broadcast %342 : vector<1x1xf32> to vector<1x128xf32>
      %359 = arith.mulf %358, %25 : vector<1x128xf32>
      %360 = arith.addf %357, %359 : vector<1x128xf32>
      %361 = vector.broadcast %343 : vector<1x1xf32> to vector<1x128xf32>
      %362 = arith.mulf %361, %29 : vector<1x128xf32>
      %363 = arith.addf %360, %362 : vector<1x128xf32>
      %364 = vector.broadcast %349 : vector<1x1xf32> to vector<1x128xf32>
      %365 = arith.mulf %364, %33 : vector<1x128xf32>
      %366 = arith.addf %363, %365 : vector<1x128xf32>
      %367 = vector.broadcast %340 : vector<1x1xf32> to vector<1x128xf32>
      %368 = arith.mulf %367, %37 : vector<1x128xf32>
      %369 = arith.addf %366, %368 : vector<1x128xf32>
      %370 = vector.broadcast %341 : vector<1x1xf32> to vector<1x128xf32>
      %371 = arith.mulf %370, %41 : vector<1x128xf32>
      %372 = arith.addf %369, %371 : vector<1x128xf32>
      %373 = vector.broadcast %344 : vector<1x1xf32> to vector<1x128xf32>
      %374 = arith.mulf %373, %45 : vector<1x128xf32>
      %375 = arith.addf %372, %374 : vector<1x128xf32>
      %376 = vector.broadcast %347 : vector<1x1xf32> to vector<1x128xf32>
      %377 = arith.mulf %376, %49 : vector<1x128xf32>
      %378 = arith.addf %375, %377 : vector<1x128xf32>
      %379 = arith.index_cast %316 : i32 to index
      %c0_64 = arith.constant 0 : index
      %380 = vector.load %arg4[%379, %c0_64] : memref<64x128xf32, #tpu.memory_space<vmem>>, vector<1x128xf32>
      tpu.vector_store %arg4[%379, %c0_64], %378 {strides = array<i32>} : memref<64x128xf32, #tpu.memory_space<vmem>>, vector<1x128xf32>,
      %c5_i32_65 = arith.constant 5 : i32
      %381 = arith.addi %55, %c5_i32_65 : i32
      %382 = arith.index_cast %381 : i32 to index
      %c0_66 = arith.constant 0 : index
      %383 = vector.load %arg1[%382, %c0_66] : memref<64x1xf32, #tpu.memory_space<vmem>>, vector<1x1xf32>
      %384 = arith.index_cast %381 : i32 to index
      %c0_67 = arith.constant 0 : index
      %385 = vector.load %arg2[%384, %c0_67] : memref<64x1xf32, #tpu.memory_space<vmem>>, vector<1x1xf32>
      %cst_68 = arith.constant 9.99999997E-7 : f32
      %386 = vector.broadcast %cst_68 : f32 to vector<1x1xf32>
      %387 = arith.addf %352, %386 : vector<1x1xf32>
      %cst_69 = arith.constant 1.000000e+00 : f32
      %388 = vector.broadcast %cst_69 : f32 to vector<1x1xf32>
      %389 = arith.divf %388, %387 : vector<1x1xf32>
      %390 = arith.subf %352, %5 : vector<1x1xf32>
      %391 = arith.mulf %390, %6 : vector<1x1xf32>
      %392 = vector.broadcast %391 : vector<1x1xf32> to vector<8x128xf32>
      %393 = arith.mulf %0, %392 : vector<8x128xf32>
      %394 = arith.addf %393, %1 : vector<8x128xf32>
      %395 = math.tanh %394 : vector<8x128xf32>
      %396 = arith.mulf %2, %395 : vector<8x128xf32>
      %cst_70 = arith.constant dense<0.000000e+00> : vector<8xf32>
      %397 = vector.multi_reduction <add>, %396, %cst_70 [1] : vector<8x128xf32> to vector<8xf32>
      %398 = vector.shape_cast %397 : vector<8xf32> to vector<8x1xf32>
      %399 = arith.addf %398, %3 : vector<8x1xf32>
      %400 = math.tanh %399 : vector<8x1xf32>
      %cst_71 = arith.constant 5.000000e-01 : f32
      %401 = vector.broadcast %cst_71 : f32 to vector<8x1xf32>
      %402 = arith.mulf %401, %400 : vector<8x1xf32>
      %cst_72 = arith.constant 5.000000e-01 : f32
      %403 = vector.broadcast %cst_72 : f32 to vector<8x1xf32>
      %404 = arith.addf %402, %403 : vector<8x1xf32>
      %405 = vector.extract_strided_slice %404 {offsets = [0, 0], sizes = [1, 1], strides = [1, 1]} : vector<8x1xf32> to vector<1x1xf32>
      %406 = vector.extract_strided_slice %404 {offsets = [1, 0], sizes = [1, 1], strides = [1, 1]} : vector<8x1xf32> to vector<1x1xf32>
      %407 = arith.mulf %406, %352 : vector<1x1xf32>
      %408 = arith.minimumf %407, %385 : vector<1x1xf32>
      %409 = arith.mulf %408, %389 : vector<1x1xf32>
      %cst_73 = arith.constant 1.000000e+00 : f32
      %410 = vector.broadcast %cst_73 : f32 to vector<1x1xf32>
      %411 = arith.subf %410, %405 : vector<1x1xf32>
      %412 = arith.subf %411, %409 : vector<1x1xf32>
      %413 = arith.mulf %405, %352 : vector<1x1xf32>
      %414 = arith.mulf %8, %383 : vector<1x1xf32>
      %415 = arith.mulf %412, %352 : vector<1x1xf32>
      %416 = arith.mulf %7, %383 : vector<1x1xf32>
      %417 = arith.addf %415, %416 : vector<1x1xf32>
      %418 = vector.broadcast %413 : vector<1x1xf32> to vector<1x128xf32>
      %419 = arith.mulf %418, %17 : vector<1x128xf32>
      %420 = vector.broadcast %417 : vector<1x1xf32> to vector<1x128xf32>
      %421 = arith.mulf %420, %21 : vector<1x128xf32>
      %422 = arith.addf %419, %421 : vector<1x128xf32>
      %423 = vector.broadcast %407 : vector<1x1xf32> to vector<1x128xf32>
      %424 = arith.mulf %423, %25 : vector<1x128xf32>
      %425 = arith.addf %422, %424 : vector<1x128xf32>
      %426 = vector.broadcast %408 : vector<1x1xf32> to vector<1x128xf32>
      %427 = arith.mulf %426, %29 : vector<1x128xf32>
      %428 = arith.addf %425, %427 : vector<1x128xf32>
      %429 = vector.broadcast %414 : vector<1x1xf32> to vector<1x128xf32>
      %430 = arith.mulf %429, %33 : vector<1x128xf32>
      %431 = arith.addf %428, %430 : vector<1x128xf32>
      %432 = vector.broadcast %405 : vector<1x1xf32> to vector<1x128xf32>
      %433 = arith.mulf %432, %37 : vector<1x128xf32>
      %434 = arith.addf %431, %433 : vector<1x128xf32>
      %435 = vector.broadcast %406 : vector<1x1xf32> to vector<1x128xf32>
      %436 = arith.mulf %435, %41 : vector<1x128xf32>
      %437 = arith.addf %434, %436 : vector<1x128xf32>
      %438 = vector.broadcast %409 : vector<1x1xf32> to vector<1x128xf32>
      %439 = arith.mulf %438, %45 : vector<1x128xf32>
      %440 = arith.addf %437, %439 : vector<1x128xf32>
      %441 = vector.broadcast %412 : vector<1x1xf32> to vector<1x128xf32>
      %442 = arith.mulf %441, %49 : vector<1x128xf32>
      %443 = arith.addf %440, %442 : vector<1x128xf32>
      %444 = arith.index_cast %381 : i32 to index
      %c0_74 = arith.constant 0 : index
      %445 = vector.load %arg4[%444, %c0_74] : memref<64x128xf32, #tpu.memory_space<vmem>>, vector<1x128xf32>
      tpu.vector_store %arg4[%444, %c0_74], %443 {strides = array<i32>} : memref<64x128xf32, #tpu.memory_space<vmem>>, vector<1x128xf32>,
      %c6_i32_75 = arith.constant 6 : i32
      %446 = arith.addi %55, %c6_i32_75 : i32
      %447 = arith.index_cast %446 : i32 to index
      %c0_76 = arith.constant 0 : index
      %448 = vector.load %arg1[%447, %c0_76] : memref<64x1xf32, #tpu.memory_space<vmem>>, vector<1x1xf32>
      %449 = arith.index_cast %446 : i32 to index
      %c0_77 = arith.constant 0 : index
      %450 = vector.load %arg2[%449, %c0_77] : memref<64x1xf32, #tpu.memory_space<vmem>>, vector<1x1xf32>
      %cst_78 = arith.constant 9.99999997E-7 : f32
      %451 = vector.broadcast %cst_78 : f32 to vector<1x1xf32>
      %452 = arith.addf %417, %451 : vector<1x1xf32>
      %cst_79 = arith.constant 1.000000e+00 : f32
      %453 = vector.broadcast %cst_79 : f32 to vector<1x1xf32>
      %454 = arith.divf %453, %452 : vector<1x1xf32>
      %455 = arith.subf %417, %5 : vector<1x1xf32>
      %456 = arith.mulf %455, %6 : vector<1x1xf32>
      %457 = vector.broadcast %456 : vector<1x1xf32> to vector<8x128xf32>
      %458 = arith.mulf %0, %457 : vector<8x128xf32>
      %459 = arith.addf %458, %1 : vector<8x128xf32>
      %460 = math.tanh %459 : vector<8x128xf32>
      %461 = arith.mulf %2, %460 : vector<8x128xf32>
      %cst_80 = arith.constant dense<0.000000e+00> : vector<8xf32>
      %462 = vector.multi_reduction <add>, %461, %cst_80 [1] : vector<8x128xf32> to vector<8xf32>
      %463 = vector.shape_cast %462 : vector<8xf32> to vector<8x1xf32>
      %464 = arith.addf %463, %3 : vector<8x1xf32>
      %465 = math.tanh %464 : vector<8x1xf32>
      %cst_81 = arith.constant 5.000000e-01 : f32
      %466 = vector.broadcast %cst_81 : f32 to vector<8x1xf32>
      %467 = arith.mulf %466, %465 : vector<8x1xf32>
      %cst_82 = arith.constant 5.000000e-01 : f32
      %468 = vector.broadcast %cst_82 : f32 to vector<8x1xf32>
      %469 = arith.addf %467, %468 : vector<8x1xf32>
      %470 = vector.extract_strided_slice %469 {offsets = [0, 0], sizes = [1, 1], strides = [1, 1]} : vector<8x1xf32> to vector<1x1xf32>
      %471 = vector.extract_strided_slice %469 {offsets = [1, 0], sizes = [1, 1], strides = [1, 1]} : vector<8x1xf32> to vector<1x1xf32>
      %472 = arith.mulf %471, %417 : vector<1x1xf32>
      %473 = arith.minimumf %472, %450 : vector<1x1xf32>
      %474 = arith.mulf %473, %454 : vector<1x1xf32>
      %cst_83 = arith.constant 1.000000e+00 : f32
      %475 = vector.broadcast %cst_83 : f32 to vector<1x1xf32>
      %476 = arith.subf %475, %470 : vector<1x1xf32>
      %477 = arith.subf %476, %474 : vector<1x1xf32>
      %478 = arith.mulf %470, %417 : vector<1x1xf32>
      %479 = arith.mulf %8, %448 : vector<1x1xf32>
      %480 = arith.mulf %477, %417 : vector<1x1xf32>
      %481 = arith.mulf %7, %448 : vector<1x1xf32>
      %482 = arith.addf %480, %481 : vector<1x1xf32>
      %483 = vector.broadcast %478 : vector<1x1xf32> to vector<1x128xf32>
      %484 = arith.mulf %483, %17 : vector<1x128xf32>
      %485 = vector.broadcast %482 : vector<1x1xf32> to vector<1x128xf32>
      %486 = arith.mulf %485, %21 : vector<1x128xf32>
      %487 = arith.addf %484, %486 : vector<1x128xf32>
      %488 = vector.broadcast %472 : vector<1x1xf32> to vector<1x128xf32>
      %489 = arith.mulf %488, %25 : vector<1x128xf32>
      %490 = arith.addf %487, %489 : vector<1x128xf32>
      %491 = vector.broadcast %473 : vector<1x1xf32> to vector<1x128xf32>
      %492 = arith.mulf %491, %29 : vector<1x128xf32>
      %493 = arith.addf %490, %492 : vector<1x128xf32>
      %494 = vector.broadcast %479 : vector<1x1xf32> to vector<1x128xf32>
      %495 = arith.mulf %494, %33 : vector<1x128xf32>
      %496 = arith.addf %493, %495 : vector<1x128xf32>
      %497 = vector.broadcast %470 : vector<1x1xf32> to vector<1x128xf32>
      %498 = arith.mulf %497, %37 : vector<1x128xf32>
      %499 = arith.addf %496, %498 : vector<1x128xf32>
      %500 = vector.broadcast %471 : vector<1x1xf32> to vector<1x128xf32>
      %501 = arith.mulf %500, %41 : vector<1x128xf32>
      %502 = arith.addf %499, %501 : vector<1x128xf32>
      %503 = vector.broadcast %474 : vector<1x1xf32> to vector<1x128xf32>
      %504 = arith.mulf %503, %45 : vector<1x128xf32>
      %505 = arith.addf %502, %504 : vector<1x128xf32>
      %506 = vector.broadcast %477 : vector<1x1xf32> to vector<1x128xf32>
      %507 = arith.mulf %506, %49 : vector<1x128xf32>
      %508 = arith.addf %505, %507 : vector<1x128xf32>
      %509 = arith.index_cast %446 : i32 to index
      %c0_84 = arith.constant 0 : index
      %510 = vector.load %arg4[%509, %c0_84] : memref<64x128xf32, #tpu.memory_space<vmem>>, vector<1x128xf32>
      tpu.vector_store %arg4[%509, %c0_84], %508 {strides = array<i32>} : memref<64x128xf32, #tpu.memory_space<vmem>>, vector<1x128xf32>,
      %c7_i32_85 = arith.constant 7 : i32
      %511 = arith.addi %55, %c7_i32_85 : i32
      %512 = arith.index_cast %511 : i32 to index
      %c0_86 = arith.constant 0 : index
      %513 = vector.load %arg1[%512, %c0_86] : memref<64x1xf32, #tpu.memory_space<vmem>>, vector<1x1xf32>
      %514 = arith.index_cast %511 : i32 to index
      %c0_87 = arith.constant 0 : index
      %515 = vector.load %arg2[%514, %c0_87] : memref<64x1xf32, #tpu.memory_space<vmem>>, vector<1x1xf32>
      %cst_88 = arith.constant 9.99999997E-7 : f32
      %516 = vector.broadcast %cst_88 : f32 to vector<1x1xf32>
      %517 = arith.addf %482, %516 : vector<1x1xf32>
      %cst_89 = arith.constant 1.000000e+00 : f32
      %518 = vector.broadcast %cst_89 : f32 to vector<1x1xf32>
      %519 = arith.divf %518, %517 : vector<1x1xf32>
      %520 = arith.subf %482, %5 : vector<1x1xf32>
      %521 = arith.mulf %520, %6 : vector<1x1xf32>
      %522 = vector.broadcast %521 : vector<1x1xf32> to vector<8x128xf32>
      %523 = arith.mulf %0, %522 : vector<8x128xf32>
      %524 = arith.addf %523, %1 : vector<8x128xf32>
      %525 = math.tanh %524 : vector<8x128xf32>
      %526 = arith.mulf %2, %525 : vector<8x128xf32>
      %cst_90 = arith.constant dense<0.000000e+00> : vector<8xf32>
      %527 = vector.multi_reduction <add>, %526, %cst_90 [1] : vector<8x128xf32> to vector<8xf32>
      %528 = vector.shape_cast %527 : vector<8xf32> to vector<8x1xf32>
      %529 = arith.addf %528, %3 : vector<8x1xf32>
      %530 = math.tanh %529 : vector<8x1xf32>
      %cst_91 = arith.constant 5.000000e-01 : f32
      %531 = vector.broadcast %cst_91 : f32 to vector<8x1xf32>
      %532 = arith.mulf %531, %530 : vector<8x1xf32>
      %cst_92 = arith.constant 5.000000e-01 : f32
      %533 = vector.broadcast %cst_92 : f32 to vector<8x1xf32>
      %534 = arith.addf %532, %533 : vector<8x1xf32>
      %535 = vector.extract_strided_slice %534 {offsets = [0, 0], sizes = [1, 1], strides = [1, 1]} : vector<8x1xf32> to vector<1x1xf32>
      %536 = vector.extract_strided_slice %534 {offsets = [1, 0], sizes = [1, 1], strides = [1, 1]} : vector<8x1xf32> to vector<1x1xf32>
      %537 = arith.mulf %536, %482 : vector<1x1xf32>
      %538 = arith.minimumf %537, %515 : vector<1x1xf32>
      %539 = arith.mulf %538, %519 : vector<1x1xf32>
      %cst_93 = arith.constant 1.000000e+00 : f32
      %540 = vector.broadcast %cst_93 : f32 to vector<1x1xf32>
      %541 = arith.subf %540, %535 : vector<1x1xf32>
      %542 = arith.subf %541, %539 : vector<1x1xf32>
      %543 = arith.mulf %535, %482 : vector<1x1xf32>
      %544 = arith.mulf %8, %513 : vector<1x1xf32>
      %545 = arith.mulf %542, %482 : vector<1x1xf32>
      %546 = arith.mulf %7, %513 : vector<1x1xf32>
      %547 = arith.addf %545, %546 : vector<1x1xf32>
      %548 = vector.broadcast %543 : vector<1x1xf32> to vector<1x128xf32>
      %549 = arith.mulf %548, %17 : vector<1x128xf32>
      %550 = vector.broadcast %547 : vector<1x1xf32> to vector<1x128xf32>
      %551 = arith.mulf %550, %21 : vector<1x128xf32>
      %552 = arith.addf %549, %551 : vector<1x128xf32>
      %553 = vector.broadcast %537 : vector<1x1xf32> to vector<1x128xf32>
      %554 = arith.mulf %553, %25 : vector<1x128xf32>
      %555 = arith.addf %552, %554 : vector<1x128xf32>
      %556 = vector.broadcast %538 : vector<1x1xf32> to vector<1x128xf32>
      %557 = arith.mulf %556, %29 : vector<1x128xf32>
      %558 = arith.addf %555, %557 : vector<1x128xf32>
      %559 = vector.broadcast %544 : vector<1x1xf32> to vector<1x128xf32>
      %560 = arith.mulf %559, %33 : vector<1x128xf32>
      %561 = arith.addf %558, %560 : vector<1x128xf32>
      %562 = vector.broadcast %535 : vector<1x1xf32> to vector<1x128xf32>
      %563 = arith.mulf %562, %37 : vector<1x128xf32>
      %564 = arith.addf %561, %563 : vector<1x128xf32>
      %565 = vector.broadcast %536 : vector<1x1xf32> to vector<1x128xf32>
      %566 = arith.mulf %565, %41 : vector<1x128xf32>
      %567 = arith.addf %564, %566 : vector<1x128xf32>
      %568 = vector.broadcast %539 : vector<1x1xf32> to vector<1x128xf32>
      %569 = arith.mulf %568, %45 : vector<1x128xf32>
      %570 = arith.addf %567, %569 : vector<1x128xf32>
      %571 = vector.broadcast %542 : vector<1x1xf32> to vector<1x128xf32>
      %572 = arith.mulf %571, %49 : vector<1x128xf32>
      %573 = arith.addf %570, %572 : vector<1x128xf32>
      %574 = arith.index_cast %511 : i32 to index
      %c0_94 = arith.constant 0 : index
      %575 = vector.load %arg4[%574, %c0_94] : memref<64x128xf32, #tpu.memory_space<vmem>>, vector<1x128xf32>
      tpu.vector_store %arg4[%574, %c0_94], %573 {strides = array<i32>} : memref<64x128xf32, #tpu.memory_space<vmem>>, vector<1x128xf32>,
      scf.yield %547 : vector<1x1xf32>
    }
    %c8_i32_12 = arith.constant 8 : i32
    %c0_13 = arith.constant 0 : index
    %c0_14 = arith.constant 0 : index
    %53 = vector.load %arg5[%c0_13, %c0_14] : memref<1x1xf32, #tpu.memory_space<vmem>>, vector<1x1xf32>
    tpu.vector_store %arg5[%c0_13, %c0_14], %52 {strides = array<i32>} : memref<1x1xf32, #tpu.memory_space<vmem>>, vector<1x1xf32>,
    return
  }
  func.func @transform_0(%arg0: i32) -> (i32, i32) {
    %c0_i32 = arith.constant 0 : i32
    %c0_i32_0 = arith.constant 0 : i32
    return %arg0, %c0_i32 : i32, i32
  }
  func.func @transform_1(%arg0: i32) -> (i32, i32) {
    %c0_i32 = arith.constant 0 : i32
    %c0_i32_0 = arith.constant 0 : i32
    return %arg0, %c0_i32 : i32, i32
  }
  func.func @transform_2(%arg0: i32) -> (i32, i32) {
    %c0_i32 = arith.constant 0 : i32
    %c0_i32_0 = arith.constant 0 : i32
    %c0_i32_1 = arith.constant 0 : i32
    return %c0_i32, %c0_i32_0 : i32, i32
  }
  func.func @transform_3(%arg0: i32) -> (i32, i32) {
    %c0_i32 = arith.constant 0 : i32
    %c0_i32_0 = arith.constant 0 : i32
    return %arg0, %c0_i32 : i32, i32
  }
}

</mosaic_0001>

<llo_original>
// kernel: mcpbrnn_cell_forward.1
$region0: #{mcpbrnn_cell_forward.1}
  #allocation0 [shape = 'u32[]', space=smem, size = 0x4, offset = 0x4, fixed_abs, tag = 'smem constant byte address 0x4 - core index']
  #allocation1 [shape = 'u32[144,128]{1,0:T(1,128)}', space=vmem, size = 0x12000, scoped, tag = 'internal scratch']
  #allocation2 [shape = 'f32[1,1]{1,0:T(1,128)}', space=vmem, size = 0x200, scoped, tag = 'scratch operand']
  %s0 = inlined_call_operand.vmem [shape: f32[64,1], index: 0, kind: input, shape index: {}]
  %s1 = inlined_call_operand.vmem [shape: f32[64,1], index: 1, kind: input, shape index: {}]
  %s2 = inlined_call_operand.vmem [shape: f32[8,512], index: 2, kind: input, shape index: {}]
  %s3 = inlined_call_operand.vmem [shape: f32[64,128], index: 3, kind: output, shape index: {}]
  %s4 = sld [smem:[#allocation0]]
  $region33: #{mcpbrnn_cell_forward.1} parent=0
    _
  %s6 = ssub.s32 1, %s4
  %s7 = scalar_select 0, %s6, %s4
  // Predicated region
  $region2: #{mcpbrnn_cell_forward.1} parent=0 // pred_check
    _
  $region3: #{mcpbrnn_cell_forward.1} parent=0 // pred_check_branch
    %9 = sbr.rel (0) target = $region5
  $region4: #{mcpbrnn_cell_forward.1} parent=0 // pred_region
    _
  $region5: #{mcpbrnn_cell_forward.1} parent=0 // pred_fallthru
    _
  // Predicated region
  $region6: #{mcpbrnn_cell_forward.1} parent=0 // pred_check
    _
  $region7: #{mcpbrnn_cell_forward.1} parent=0 // pred_check_branch
    %11 = sbr.rel (0) target = $region9
  $region8: #{mcpbrnn_cell_forward.1} parent=0 // pred_region
    _
  $region9: #{mcpbrnn_cell_forward.1} parent=0 // pred_fallthru
    _
  // Predicated region
  $region10: #{mcpbrnn_cell_forward.1} parent=0 // pred_check
    _
  $region11: #{mcpbrnn_cell_forward.1} parent=0 // pred_check_branch
    %13 = sbr.rel (0) target = $region13
  $region12: #{mcpbrnn_cell_forward.1} parent=0 // pred_region
    _
  $region13: #{mcpbrnn_cell_forward.1} parent=0 // pred_fallthru
    _
  %v14 = vld [vmem:[%s2] sm:$0xff]
  %v15 = vld [vmem:[%s2 + $0x8] sm:$0xff]
  %v16 = vld [vmem:[%s2 + $0x10] sm:$0xff]
  %v17 = vld [vmem:[%s2 + $0x18] sm:$0xff]
  %p18 = scmp.eq.s32.totalorder 0, 0
  // Predicated region
  $region14: #{mcpbrnn_cell_forward.1} parent=0 // pred_check
    %p19 = pneg %p18
  $region15: #{mcpbrnn_cell_forward.1} parent=0 // pred_check_branch
    %21 = sbr.rel (%p19) target = $region17
  $region16: #{mcpbrnn_cell_forward.1} parent=0 // pred_region
    %23 = vrot.lane.b32.xlu0 %v17, 127
    %v24 = vpop.permute.xlu0 %23
    %vm26 = vcmask 4100
    %27 = vst.msk [vmem:[#allocation2 - $0x4] sm:$0x10] %vm26, %v24
  $region17: #{mcpbrnn_cell_forward.1} parent=0 // pred_fallthru
    _
  %v28 = vlaneseq
  %v29 = vand.u32 %v28, 127
  %vm30 = vcmp.eq.s32.totalorder %v29, 0
  %v31 = vsel %vm30, 1, 0
  %v32 = vcvt.s32.f32 %v31
  %vm33 = vcmp.eq.s32.totalorder %v29, 1
  %v34 = vsel %vm33, 1, 0
  %v35 = vcvt.s32.f32 %v34
  %vm36 = vcmp.eq.s32.totalorder %v29, 2
  %v37 = vsel %vm36, 1, 0
  %v38 = vcvt.s32.f32 %v37
  %vm39 = vcmp.eq.s32.totalorder %v29, 3
  %v40 = vsel %vm39, 1, 0
  %v41 = vcvt.s32.f32 %v40
  %vm42 = vcmp.eq.s32.totalorder %v29, 4
  %v43 = vsel %vm42, 1, 0
  %v44 = vcvt.s32.f32 %v43
  %vm45 = vcmp.eq.s32.totalorder %v29, 5
  %v46 = vsel %vm45, 1, 0
  %v47 = vcvt.s32.f32 %v46
  %vm48 = vcmp.eq.s32.totalorder %v29, 6
  %v49 = vsel %vm48, 1, 0
  %v50 = vcvt.s32.f32 %v49
  %vm51 = vcmp.eq.s32.totalorder %v29, 7
  %v52 = vsel %vm51, 1, 0
  %v53 = vcvt.s32.f32 %v52
  %vm54 = vcmp.eq.s32.totalorder %v29, 8
  %v55 = vsel %vm54, 1, 0
  %v56 = vcvt.s32.f32 %v55
  %v57 = vld [vmem:[#allocation2] sm:$0x1]
  loop: start=0, step=1, limit=8
  $region18: #{mcpbrnn_cell_forward.1} parent=0 // loop_pre_header
    _
  $region19: #{mcpbrnn_cell_forward.1} parent=0 // loop_header
    %s59 = sphi 0, %s63
    %p60 = scmp.ge.s32.totalorder %s59, 8
    %v64 = vphi %v57, %v1056
  $region20: #{mcpbrnn_cell_forward.1} parent=0 // loop_header_branch
    %62 = sbr.rel (%p60) target = $region24
  $region21: #{mcpbrnn_cell_forward.1} parent=0 // loop_body
    %s65 = smul.u32 %s59, 8
    %s66 = scalar_lea.vmem %s0, %s65
    %v67 = vld [vmem:[%s66] sm:$0x1]
    %s68 = scalar_lea.vmem %s1, %s65
    %v69 = vld [vmem:[%s68] sm:$0x1]
    %v70 = vadd.f32 %v64, 1e-06
    %v71 = vrcp.pop %v70
    %v72 = vmul.f32 1.0, %v71
    %74 = vrot.lane.b32.xlu0 %v17, 127
    %v75 = vpop.permute.xlu0 %74
    %v77 = vsub.f32 %v64, %v75
    %v78 = vrot.slane %v17, 1
    %79 = vrot.lane.b32.xlu0 %v78, 127
    %v80 = vpop.permute.xlu0 %79
    %v82 = vmul.f32 %v77, %v80
    %s84 = vtos %v82
    %v85 = vstv %s84
    %v87 = vmul.f32 %v14, %v85
    %v88 = vadd.f32 %v87, %v15
    %v89 = vtanh.pop %v88
    %v90 = vmul.f32 %v16, %v89
    %91 = vadd.xlane.f32.xlu0 %v90
    %v92 = vpop.xlane.xlu0 %91
    %v93 = vadd.f32 %v92, %v17
    %v94 = vtanh.pop %v93
    %v95 = vmul.f32 %v94, 0.5
    %v96 = vadd.f32 %v95, 0.5
    %v98 = vrot.slane %v64, 7
    %v100 = vmul.f32 %v96, %v98
    %v102 = vrot.slane %v69, 7
    %v104 = vmin.f32 %v100, %v102
    %v106 = vrot.slane %v72, 7
    %v108 = vmul.f32 %v104, %v106
    %v109 = vsub.f32 1.0, %v96
    %v111 = vrot.slane %v108, 1
    %v113 = vsub.f32 %v109, %v111
    %v114 = vmul.f32 %v96, %v64
    %v116 = vrot.slane %v67, 5
    %117 = vrot.lane.b32.xlu0 %v116, 1
    %v118 = vpop.permute.xlu0 %117
    %v120 = vmul.f32 %v17, %v118
    %v121 = vmul.f32 %v113, %v64
    %v122 = vrot.slane %v67, 6
    %123 = vrot.lane.b32.xlu0 %v122, 1
    %v124 = vpop.permute.xlu0 %123
    %v126 = vmul.f32 %v17, %v124
    %v128 = vrot.slane %v126, 2
    %129 = vrot.lane.b32.xlu0 %v128, 127
    %v130 = vpop.permute.xlu0 %129
    %v132 = vadd.f32 %v121, %v130
    %134 = vset.pattern.permute.xlu0 0
    %135 = vperm.xlu0 %134, %v114
    %v136 = vpop.permute.xlu0 %135
    %v138 = vmul.f32 %v136, %v32
    %140 = vset.pattern.permute.xlu0 0
    %141 = vperm.xlu0 %140, %v132
    %v142 = vpop.permute.xlu0 %141
    %v144 = vmul.f32 %v142, %v35
    %v145 = vadd.f32 %v138, %v144
    %147 = vset.pattern.permute.xlu0 0
    %148 = vperm.xlu0 %147, %v100
    %v149 = vpop.permute.xlu0 %148
    %v151 = vmul.f32 %v149, %v38
    %v153 = vrot.slane %v151, 1
    %v155 = vadd.f32 %v145, %v153
    %157 = vset.pattern.permute.xlu0 0
    %158 = vperm.xlu0 %157, %v104
    %v159 = vpop.permute.xlu0 %158
    %v161 = vmul.f32 %v159, %v41
    %v163 = vrot.slane %v161, 1
    %v165 = vadd.f32 %v155, %v163
    %167 = vset.pattern.permute.xlu0 1
    %168 = vperm.xlu0 %167, %v120
    %v169 = vpop.permute.xlu0 %168
    %v171 = vmul.f32 %v169, %v44
    %v173 = vrot.slane %v171, 3
    %v175 = vadd.f32 %v165, %v173
    %177 = vset.pattern.permute.xlu0 0
    %178 = vperm.xlu0 %177, %v96
    %v179 = vpop.permute.xlu0 %178
    %v181 = vmul.f32 %v179, %v47
    %v182 = vadd.f32 %v175, %v181
    %v183 = vmul.f32 %v179, %v50
    %v185 = vrot.slane %v183, 1
    %v187 = vadd.f32 %v182, %v185
    %188 = vset.pattern.permute.xlu0 0
    %189 = vperm.xlu0 %188, %v108
    %v190 = vpop.permute.xlu0 %189
    %v192 = vmul.f32 %v190, %v53
    %v194 = vrot.slane %v192, 1
    %v196 = vadd.f32 %v187, %v194
    %198 = vset.pattern.permute.xlu0 0
    %199 = vperm.xlu0 %198, %v113
    %v200 = vpop.permute.xlu0 %199
    %v202 = vmul.f32 %v200, %v56
    %v203 = vadd.f32 %v196, %v202
    %s204 = scalar_lea.vmem %s3, %s65
    %205 = vst [vmem:[%s204] sm:$0x1] %v203
    %s206 = sadd.s32 %s65, 1
    %s207 = scalar_lea.vmem %s0, %s206
    %v208 = vld [vmem:[%s207] sm:$0x1]
    %s209 = scalar_lea.vmem %s1, %s206
    %v210 = vld [vmem:[%s209] sm:$0x1]
    %v211 = vadd.f32 %v132, 1e-06
    %v212 = vrcp.pop %v211
    %v213 = vmul.f32 1.0, %v212
    %v214 = vsub.f32 %v132, %v75
    %v215 = vmul.f32 %v214, %v80
    %s217 = vtos %v215
    %v218 = vstv %s217
    %v220 = vmul.f32 %v14, %v218
    %v221 = vadd.f32 %v220, %v15
    %v222 = vtanh.pop %v221
    %v223 = vmul.f32 %v16, %v222
    %224 = vadd.xlane.f32.xlu0 %v223
    %v225 = vpop.xlane.xlu0 %224
    %v226 = vadd.f32 %v225, %v17
    %v227 = vtanh.pop %v226
    %v228 = vmul.f32 %v227, 0.5
    %v229 = vadd.f32 %v228, 0.5
    %v230 = vrot.slane %v132, 7
    %v232 = vmul.f32 %v229, %v230
    %v234 = vrot.slane %v210, 7
    %v236 = vmin.f32 %v232, %v234
    %v238 = vrot.slane %v213, 7
    %v240 = vmul.f32 %v236, %v238
    %v241 = vsub.f32 1.0, %v229
    %v243 = vrot.slane %v240, 1
    %v245 = vsub.f32 %v241, %v243
    %v246 = vmul.f32 %v229, %v132
    %v248 = vrot.slane %v208, 5
    %249 = vrot.lane.b32.xlu0 %v248, 1
    %v250 = vpop.permute.xlu0 %249
    %v252 = vmul.f32 %v17, %v250
    %v253 = vmul.f32 %v245, %v132
    %v254 = vrot.slane %v208, 6
    %255 = vrot.lane.b32.xlu0 %v254, 1
    %v256 = vpop.permute.xlu0 %255
    %v258 = vmul.f32 %v17, %v256
    %v260 = vrot.slane %v258, 2
    %261 = vrot.lane.b32.xlu0 %v260, 127
    %v262 = vpop.permute.xlu0 %261
    %v264 = vadd.f32 %v253, %v262
    %266 = vset.pattern.permute.xlu0 0
    %267 = vperm.xlu0 %266, %v246
    %v268 = vpop.permute.xlu0 %267
    %v270 = vmul.f32 %v268, %v32
    %272 = vset.pattern.permute.xlu0 0
    %273 = vperm.xlu0 %272, %v264
    %v274 = vpop.permute.xlu0 %273
    %v276 = vmul.f32 %v274, %v35
    %v277 = vadd.f32 %v270, %v276
    %279 = vset.pattern.permute.xlu0 0
    %280 = vperm.xlu0 %279, %v232
    %v281 = vpop.permute.xlu0 %280
    %v283 = vmul.f32 %v281, %v38
    %v285 = vrot.slane %v283, 1
    %v287 = vadd.f32 %v277, %v285
    %289 = vset.pattern.permute.xlu0 0
    %290 = vperm.xlu0 %289, %v236
    %v291 = vpop.permute.xlu0 %290
    %v293 = vmul.f32 %v291, %v41
    %v295 = vrot.slane %v293, 1
    %v297 = vadd.f32 %v287, %v295
    %299 = vset.pattern.permute.xlu0 1
    %300 = vperm.xlu0 %299, %v252
    %v301 = vpop.permute.xlu0 %300
    %v303 = vmul.f32 %v301, %v44
    %v305 = vrot.slane %v303, 3
    %v307 = vadd.f32 %v297, %v305
    %309 = vset.pattern.permute.xlu0 0
    %310 = vperm.xlu0 %309, %v229
    %v311 = vpop.permute.xlu0 %310
    %v313 = vmul.f32 %v311, %v47
    %v314 = vadd.f32 %v307, %v313
    %v315 = vmul.f32 %v311, %v50
    %v317 = vrot.slane %v315, 1
    %v319 = vadd.f32 %v314, %v317
    %320 = vset.pattern.permute.xlu0 0
    %321 = vperm.xlu0 %320, %v240
    %v322 = vpop.permute.xlu0 %321
    %v324 = vmul.f32 %v322, %v53
    %v326 = vrot.slane %v324, 1
    %v328 = vadd.f32 %v319, %v326
    %330 = vset.pattern.permute.xlu0 0
    %331 = vperm.xlu0 %330, %v245
    %v332 = vpop.permute.xlu0 %331
    %v334 = vmul.f32 %v332, %v56
    %v335 = vadd.f32 %v328, %v334
    %s336 = scalar_lea.vmem %s3, %s206
    %337 = vst [vmem:[%s336] sm:$0x1] %v335
    %s338 = sadd.s32 %s65, 2
    %s339 = scalar_lea.vmem %s0, %s338
    %v340 = vld [vmem:[%s339] sm:$0x1]
    %s341 = scalar_lea.vmem %s1, %s338
    %v342 = vld [vmem:[%s341] sm:$0x1]
    %v343 = vadd.f32 %v264, 1e-06
    %v344 = vrcp.pop %v343
    %v345 = vmul.f32 1.0, %v344
    %v346 = vsub.f32 %v264, %v75
    %v347 = vmul.f32 %v346, %v80
    %s349 = vtos %v347
    %v350 = vstv %s349
    %v352 = vmul.f32 %v14, %v350
    %v353 = vadd.f32 %v352, %v15
    %v354 = vtanh.pop %v353
    %v355 = vmul.f32 %v16, %v354
    %356 = vadd.xlane.f32.xlu0 %v355
    %v357 = vpop.xlane.xlu0 %356
    %v358 = vadd.f32 %v357, %v17
    %v359 = vtanh.pop %v358
    %v360 = vmul.f32 %v359, 0.5
    %v361 = vadd.f32 %v360, 0.5
    %v362 = vrot.slane %v264, 7
    %v364 = vmul.f32 %v361, %v362
    %v366 = vrot.slane %v342, 7
    %v368 = vmin.f32 %v364, %v366
    %v370 = vrot.slane %v345, 7
    %v372 = vmul.f32 %v368, %v370
    %v373 = vsub.f32 1.0, %v361
    %v375 = vrot.slane %v372, 1
    %v377 = vsub.f32 %v373, %v375
    %v378 = vmul.f32 %v361, %v264
    %v380 = vrot.slane %v340, 5
    %381 = vrot.lane.b32.xlu0 %v380, 1
    %v382 = vpop.permute.xlu0 %381
    %v384 = vmul.f32 %v17, %v382
    %v385 = vmul.f32 %v377, %v264
    %v386 = vrot.slane %v340, 6
    %387 = vrot.lane.b32.xlu0 %v386, 1
    %v388 = vpop.permute.xlu0 %387
    %v390 = vmul.f32 %v17, %v388
    %v392 = vrot.slane %v390, 2
    %393 = vrot.lane.b32.xlu0 %v392, 127
    %v394 = vpop.permute.xlu0 %393
    %v396 = vadd.f32 %v385, %v394
    %398 = vset.pattern.permute.xlu0 0
    %399 = vperm.xlu0 %398, %v378
    %v400 = vpop.permute.xlu0 %399
    %v402 = vmul.f32 %v400, %v32
    %404 = vset.pattern.permute.xlu0 0
    %405 = vperm.xlu0 %404, %v396
    %v406 = vpop.permute.xlu0 %405
    %v408 = vmul.f32 %v406, %v35
    %v409 = vadd.f32 %v402, %v408
    %411 = vset.pattern.permute.xlu0 0
    %412 = vperm.xlu0 %411, %v364
    %v413 = vpop.permute.xlu0 %412
    %v415 = vmul.f32 %v413, %v38
    %v417 = vrot.slane %v415, 1
    %v419 = vadd.f32 %v409, %v417
    %421 = vset.pattern.permute.xlu0 0
    %422 = vperm.xlu0 %421, %v368
    %v423 = vpop.permute.xlu0 %422
    %v425 = vmul.f32 %v423, %v41
    %v427 = vrot.slane %v425, 1
    %v429 = vadd.f32 %v419, %v427
    %431 = vset.pattern.permute.xlu0 1
    %432 = vperm.xlu0 %431, %v384
    %v433 = vpop.permute.xlu0 %432
    %v435 = vmul.f32 %v433, %v44
    %v437 = vrot.slane %v435, 3
    %v439 = vadd.f32 %v429, %v437
    %441 = vset.pattern.permute.xlu0 0
    %442 = vperm.xlu0 %441, %v361
    %v443 = vpop.permute.xlu0 %442
    %v445 = vmul.f32 %v443, %v47
    %v446 = vadd.f32 %v439, %v445
    %v447 = vmul.f32 %v443, %v50
    %v449 = vrot.slane %v447, 1
    %v451 = vadd.f32 %v446, %v449
    %452 = vset.pattern.permute.xlu0 0
    %453 = vperm.xlu0 %452, %v372
    %v454 = vpop.permute.xlu0 %453
    %v456 = vmul.f32 %v454, %v53
    %v458 = vrot.slane %v456, 1
    %v460 = vadd.f32 %v451, %v458
    %462 = vset.pattern.permute.xlu0 0
    %463 = vperm.xlu0 %462, %v377
    %v464 = vpop.permute.xlu0 %463
    %v466 = vmul.f32 %v464, %v56
    %v467 = vadd.f32 %v460, %v466
    %s468 = scalar_lea.vmem %s3, %s338
    %469 = vst [vmem:[%s468] sm:$0x1] %v467
    %s470 = sadd.s32 %s65, 3
    %s471 = scalar_lea.vmem %s0, %s470
    %v472 = vld [vmem:[%s471] sm:$0x1]
    %s473 = scalar_lea.vmem %s1, %s470
    %v474 = vld [vmem:[%s473] sm:$0x1]
    %v475 = vadd.f32 %v396, 1e-06
    %v476 = vrcp.pop %v475
    %v477 = vmul.f32 1.0, %v476
    %v478 = vsub.f32 %v396, %v75
    %v479 = vmul.f32 %v478, %v80
    %s481 = vtos %v479
    %v482 = vstv %s481
    %v484 = vmul.f32 %v14, %v482
    %v485 = vadd.f32 %v484, %v15
    %v486 = vtanh.pop %v485
    %v487 = vmul.f32 %v16, %v486
    %488 = vadd.xlane.f32.xlu0 %v487
    %v489 = vpop.xlane.xlu0 %488
    %v490 = vadd.f32 %v489, %v17
    %v491 = vtanh.pop %v490
    %v492 = vmul.f32 %v491, 0.5
    %v493 = vadd.f32 %v492, 0.5
    %v494 = vrot.slane %v396, 7
    %v496 = vmul.f32 %v493, %v494
    %v498 = vrot.slane %v474, 7
    %v500 = vmin.f32 %v496, %v498
    %v502 = vrot.slane %v477, 7
    %v504 = vmul.f32 %v500, %v502
    %v505 = vsub.f32 1.0, %v493
    %v507 = vrot.slane %v504, 1
    %v509 = vsub.f32 %v505, %v507
    %v510 = vmul.f32 %v493, %v396
    %v512 = vrot.slane %v472, 5
    %513 = vrot.lane.b32.xlu0 %v512, 1
    %v514 = vpop.permute.xlu0 %513
    %v516 = vmul.f32 %v17, %v514
    %v517 = vmul.f32 %v509, %v396
    %v518 = vrot.slane %v472, 6
    %519 = vrot.lane.b32.xlu0 %v518, 1
    %v520 = vpop.permute.xlu0 %519
    %v522 = vmul.f32 %v17, %v520
    %v524 = vrot.slane %v522, 2
    %525 = vrot.lane.b32.xlu0 %v524, 127
    %v526 = vpop.permute.xlu0 %525
    %v528 = vadd.f32 %v517, %v526
    %530 = vset.pattern.permute.xlu0 0
    %531 = vperm.xlu0 %530, %v510
    %v532 = vpop.permute.xlu0 %531
    %v534 = vmul.f32 %v532, %v32
    %536 = vset.pattern.permute.xlu0 0
    %537 = vperm.xlu0 %536, %v528
    %v538 = vpop.permute.xlu0 %537
    %v540 = vmul.f32 %v538, %v35
    %v541 = vadd.f32 %v534, %v540
    %543 = vset.pattern.permute.xlu0 0
    %544 = vperm.xlu0 %543, %v496
    %v545 = vpop.permute.xlu0 %544
    %v547 = vmul.f32 %v545, %v38
    %v549 = vrot.slane %v547, 1
    %v551 = vadd.f32 %v541, %v549
    %553 = vset.pattern.permute.xlu0 0
    %554 = vperm.xlu0 %553, %v500
    %v555 = vpop.permute.xlu0 %554
    %v557 = vmul.f32 %v555, %v41
    %v559 = vrot.slane %v557, 1
    %v561 = vadd.f32 %v551, %v559
    %563 = vset.pattern.permute.xlu0 1
    %564 = vperm.xlu0 %563, %v516
    %v565 = vpop.permute.xlu0 %564
    %v567 = vmul.f32 %v565, %v44
    %v569 = vrot.slane %v567, 3
    %v571 = vadd.f32 %v561, %v569
    %573 = vset.pattern.permute.xlu0 0
    %574 = vperm.xlu0 %573, %v493
    %v575 = vpop.permute.xlu0 %574
    %v577 = vmul.f32 %v575, %v47
    %v578 = vadd.f32 %v571, %v577
    %v579 = vmul.f32 %v575, %v50
    %v581 = vrot.slane %v579, 1
    %v583 = vadd.f32 %v578, %v581
    %584 = vset.pattern.permute.xlu0 0
    %585 = vperm.xlu0 %584, %v504
    %v586 = vpop.permute.xlu0 %585
    %v588 = vmul.f32 %v586, %v53
    %v590 = vrot.slane %v588, 1
    %v592 = vadd.f32 %v583, %v590
    %594 = vset.pattern.permute.xlu0 0
    %595 = vperm.xlu0 %594, %v509
    %v596 = vpop.permute.xlu0 %595
    %v598 = vmul.f32 %v596, %v56
    %v599 = vadd.f32 %v592, %v598
    %s600 = scalar_lea.vmem %s3, %s470
    %601 = vst [vmem:[%s600] sm:$0x1] %v599
    %s602 = sadd.s32 %s65, 4
    %s603 = scalar_lea.vmem %s0, %s602
    %v604 = vld [vmem:[%s603] sm:$0x1]
    %s605 = scalar_lea.vmem %s1, %s602
    %v606 = vld [vmem:[%s605] sm:$0x1]
    %v607 = vadd.f32 %v528, 1e-06
    %v608 = vrcp.pop %v607
    %v609 = vmul.f32 1.0, %v608
    %v610 = vsub.f32 %v528, %v75
    %v611 = vmul.f32 %v610, %v80
    %s613 = vtos %v611
    %v614 = vstv %s613
    %v616 = vmul.f32 %v14, %v614
    %v617 = vadd.f32 %v616, %v15
    %v618 = vtanh.pop %v617
    %v619 = vmul.f32 %v16, %v618
    %620 = vadd.xlane.f32.xlu0 %v619
    %v621 = vpop.xlane.xlu0 %620
    %v622 = vadd.f32 %v621, %v17
    %v623 = vtanh.pop %v622
    %v624 = vmul.f32 %v623, 0.5
    %v625 = vadd.f32 %v624, 0.5
    %v626 = vrot.slane %v528, 7
    %v628 = vmul.f32 %v625, %v626
    %v630 = vrot.slane %v606, 7
    %v632 = vmin.f32 %v628, %v630
    %v634 = vrot.slane %v609, 7
    %v636 = vmul.f32 %v632, %v634
    %v637 = vsub.f32 1.0, %v625
    %v639 = vrot.slane %v636, 1
    %v641 = vsub.f32 %v637, %v639
    %v642 = vmul.f32 %v625, %v528
    %v644 = vrot.slane %v604, 5
    %645 = vrot.lane.b32.xlu0 %v644, 1
    %v646 = vpop.permute.xlu0 %645
    %v648 = vmul.f32 %v17, %v646
    %v649 = vmul.f32 %v641, %v528
    %v650 = vrot.slane %v604, 6
    %651 = vrot.lane.b32.xlu0 %v650, 1
    %v652 = vpop.permute.xlu0 %651
    %v654 = vmul.f32 %v17, %v652
    %v656 = vrot.slane %v654, 2
    %657 = vrot.lane.b32.xlu0 %v656, 127
    %v658 = vpop.permute.xlu0 %657
    %v660 = vadd.f32 %v649, %v658
    %662 = vset.pattern.permute.xlu0 0
    %663 = vperm.xlu0 %662, %v642
    %v664 = vpop.permute.xlu0 %663
    %v666 = vmul.f32 %v664, %v32
    %668 = vset.pattern.permute.xlu0 0
    %669 = vperm.xlu0 %668, %v660
    %v670 = vpop.permute.xlu0 %669
    %v672 = vmul.f32 %v670, %v35
    %v673 = vadd.f32 %v666, %v672
    %675 = vset.pattern.permute.xlu0 0
    %676 = vperm.xlu0 %675, %v628
    %v677 = vpop.permute.xlu0 %676
    %v679 = vmul.f32 %v677, %v38
    %v681 = vrot.slane %v679, 1
    %v683 = vadd.f32 %v673, %v681
    %685 = vset.pattern.permute.xlu0 0
    %686 = vperm.xlu0 %685, %v632
    %v687 = vpop.permute.xlu0 %686
    %v689 = vmul.f32 %v687, %v41
    %v691 = vrot.slane %v689, 1
    %v693 = vadd.f32 %v683, %v691
    %695 = vset.pattern.permute.xlu0 1
    %696 = vperm.xlu0 %695, %v648
    %v697 = vpop.permute.xlu0 %696
    %v699 = vmul.f32 %v697, %v44
    %v701 = vrot.slane %v699, 3
    %v703 = vadd.f32 %v693, %v701
    %705 = vset.pattern.permute.xlu0 0
    %706 = vperm.xlu0 %705, %v625
    %v707 = vpop.permute.xlu0 %706
    %v709 = vmul.f32 %v707, %v47
    %v710 = vadd.f32 %v703, %v709
    %v711 = vmul.f32 %v707, %v50
    %v713 = vrot.slane %v711, 1
    %v715 = vadd.f32 %v710, %v713
    %716 = vset.pattern.permute.xlu0 0
    %717 = vperm.xlu0 %716, %v636
    %v718 = vpop.permute.xlu0 %717
    %v720 = vmul.f32 %v718, %v53
    %v722 = vrot.slane %v720, 1
    %v724 = vadd.f32 %v715, %v722
    %726 = vset.pattern.permute.xlu0 0
    %727 = vperm.xlu0 %726, %v641
    %v728 = vpop.permute.xlu0 %727
    %v730 = vmul.f32 %v728, %v56
    %v731 = vadd.f32 %v724, %v730
    %s732 = scalar_lea.vmem %s3, %s602
    %733 = vst [vmem:[%s732] sm:$0x1] %v731
    %s734 = sadd.s32 %s65, 5
    %s735 = scalar_lea.vmem %s0, %s734
    %v736 = vld [vmem:[%s735] sm:$0x1]
    %s737 = scalar_lea.vmem %s1, %s734
    %v738 = vld [vmem:[%s737] sm:$0x1]
    %v739 = vadd.f32 %v660, 1e-06
    %v740 = vrcp.pop %v739
    %v741 = vmul.f32 1.0, %v740
    %v742 = vsub.f32 %v660, %v75
    %v743 = vmul.f32 %v742, %v80
    %s745 = vtos %v743
    %v746 = vstv %s745
    %v748 = vmul.f32 %v14, %v746
    %v749 = vadd.f32 %v748, %v15
    %v750 = vtanh.pop %v749
    %v751 = vmul.f32 %v16, %v750
    %752 = vadd.xlane.f32.xlu0 %v751
    %v753 = vpop.xlane.xlu0 %752
    %v754 = vadd.f32 %v753, %v17
    %v755 = vtanh.pop %v754
    %v756 = vmul.f32 %v755, 0.5
    %v757 = vadd.f32 %v756, 0.5
    %v758 = vrot.slane %v660, 7
    %v760 = vmul.f32 %v757, %v758
    %v762 = vrot.slane %v738, 7
    %v764 = vmin.f32 %v760, %v762
    %v766 = vrot.slane %v741, 7
    %v768 = vmul.f32 %v764, %v766
    %v769 = vsub.f32 1.0, %v757
    %v771 = vrot.slane %v768, 1
    %v773 = vsub.f32 %v769, %v771
    %v774 = vmul.f32 %v757, %v660
    %v776 = vrot.slane %v736, 5
    %777 = vrot.lane.b32.xlu0 %v776, 1
    %v778 = vpop.permute.xlu0 %777
    %v780 = vmul.f32 %v17, %v778
    %v781 = vmul.f32 %v773, %v660
    %v782 = vrot.slane %v736, 6
    %783 = vrot.lane.b32.xlu0 %v782, 1
    %v784 = vpop.permute.xlu0 %783
    %v786 = vmul.f32 %v17, %v784
    %v788 = vrot.slane %v786, 2
    %789 = vrot.lane.b32.xlu0 %v788, 127
    %v790 = vpop.permute.xlu0 %789
    %v792 = vadd.f32 %v781, %v790
    %794 = vset.pattern.permute.xlu0 0
    %795 = vperm.xlu0 %794, %v774
    %v796 = vpop.permute.xlu0 %795
    %v798 = vmul.f32 %v796, %v32
    %800 = vset.pattern.permute.xlu0 0
    %801 = vperm.xlu0 %800, %v792
    %v802 = vpop.permute.xlu0 %801
    %v804 = vmul.f32 %v802, %v35
    %v805 = vadd.f32 %v798, %v804
    %807 = vset.pattern.permute.xlu0 0
    %808 = vperm.xlu0 %807, %v760
    %v809 = vpop.permute.xlu0 %808
    %v811 = vmul.f32 %v809, %v38
    %v813 = vrot.slane %v811, 1
    %v815 = vadd.f32 %v805, %v813
    %817 = vset.pattern.permute.xlu0 0
    %818 = vperm.xlu0 %817, %v764
    %v819 = vpop.permute.xlu0 %818
    %v821 = vmul.f32 %v819, %v41
    %v823 = vrot.slane %v821, 1
    %v825 = vadd.f32 %v815, %v823
    %827 = vset.pattern.permute.xlu0 1
    %828 = vperm.xlu0 %827, %v780
    %v829 = vpop.permute.xlu0 %828
    %v831 = vmul.f32 %v829, %v44
    %v833 = vrot.slane %v831, 3
    %v835 = vadd.f32 %v825, %v833
    %837 = vset.pattern.permute.xlu0 0
    %838 = vperm.xlu0 %837, %v757
    %v839 = vpop.permute.xlu0 %838
    %v841 = vmul.f32 %v839, %v47
    %v842 = vadd.f32 %v835, %v841
    %v843 = vmul.f32 %v839, %v50
    %v845 = vrot.slane %v843, 1
    %v847 = vadd.f32 %v842, %v845
    %848 = vset.pattern.permute.xlu0 0
    %849 = vperm.xlu0 %848, %v768
    %v850 = vpop.permute.xlu0 %849
    %v852 = vmul.f32 %v850, %v53
    %v854 = vrot.slane %v852, 1
    %v856 = vadd.f32 %v847, %v854
    %858 = vset.pattern.permute.xlu0 0
    %859 = vperm.xlu0 %858, %v773
    %v860 = vpop.permute.xlu0 %859
    %v862 = vmul.f32 %v860, %v56
    %v863 = vadd.f32 %v856, %v862
    %s864 = scalar_lea.vmem %s3, %s734
    %865 = vst [vmem:[%s864] sm:$0x1] %v863
    %s866 = sadd.s32 %s65, 6
    %s867 = scalar_lea.vmem %s0, %s866
    %v868 = vld [vmem:[%s867] sm:$0x1]
    %s869 = scalar_lea.vmem %s1, %s866
    %v870 = vld [vmem:[%s869] sm:$0x1]
    %v871 = vadd.f32 %v792, 1e-06
    %v872 = vrcp.pop %v871
    %v873 = vmul.f32 1.0, %v872
    %v874 = vsub.f32 %v792, %v75
    %v875 = vmul.f32 %v874, %v80
    %s877 = vtos %v875
    %v878 = vstv %s877
    %v880 = vmul.f32 %v14, %v878
    %v881 = vadd.f32 %v880, %v15
    %v882 = vtanh.pop %v881
    %v883 = vmul.f32 %v16, %v882
    %884 = vadd.xlane.f32.xlu0 %v883
    %v885 = vpop.xlane.xlu0 %884
    %v886 = vadd.f32 %v885, %v17
    %v887 = vtanh.pop %v886
    %v888 = vmul.f32 %v887, 0.5
    %v889 = vadd.f32 %v888, 0.5
    %v890 = vrot.slane %v792, 7
    %v892 = vmul.f32 %v889, %v890
    %v894 = vrot.slane %v870, 7
    %v896 = vmin.f32 %v892, %v894
    %v898 = vrot.slane %v873, 7
    %v900 = vmul.f32 %v896, %v898
    %v901 = vsub.f32 1.0, %v889
    %v903 = vrot.slane %v900, 1
    %v905 = vsub.f32 %v901, %v903
    %v906 = vmul.f32 %v889, %v792
    %v908 = vrot.slane %v868, 5
    %909 = vrot.lane.b32.xlu0 %v908, 1
    %v910 = vpop.permute.xlu0 %909
    %v912 = vmul.f32 %v17, %v910
    %v913 = vmul.f32 %v905, %v792
    %v914 = vrot.slane %v868, 6
    %915 = vrot.lane.b32.xlu0 %v914, 1
    %v916 = vpop.permute.xlu0 %915
    %v918 = vmul.f32 %v17, %v916
    %v920 = vrot.slane %v918, 2
    %921 = vrot.lane.b32.xlu0 %v920, 127
    %v922 = vpop.permute.xlu0 %921
    %v924 = vadd.f32 %v913, %v922
    %926 = vset.pattern.permute.xlu0 0
    %927 = vperm.xlu0 %926, %v906
    %v928 = vpop.permute.xlu0 %927
    %v930 = vmul.f32 %v928, %v32
    %932 = vset.pattern.permute.xlu0 0
    %933 = vperm.xlu0 %932, %v924
    %v934 = vpop.permute.xlu0 %933
    %v936 = vmul.f32 %v934, %v35
    %v937 = vadd.f32 %v930, %v936
    %939 = vset.pattern.permute.xlu0 0
    %940 = vperm.xlu0 %939, %v892
    %v941 = vpop.permute.xlu0 %940
    %v943 = vmul.f32 %v941, %v38
    %v945 = vrot.slane %v943, 1
    %v947 = vadd.f32 %v937, %v945
    %949 = vset.pattern.permute.xlu0 0
    %950 = vperm.xlu0 %949, %v896
    %v951 = vpop.permute.xlu0 %950
    %v953 = vmul.f32 %v951, %v41
    %v955 = vrot.slane %v953, 1
    %v957 = vadd.f32 %v947, %v955
    %959 = vset.pattern.permute.xlu0 1
    %960 = vperm.xlu0 %959, %v912
    %v961 = vpop.permute.xlu0 %960
    %v963 = vmul.f32 %v961, %v44
    %v965 = vrot.slane %v963, 3
    %v967 = vadd.f32 %v957, %v965
    %969 = vset.pattern.permute.xlu0 0
    %970 = vperm.xlu0 %969, %v889
    %v971 = vpop.permute.xlu0 %970
    %v973 = vmul.f32 %v971, %v47
    %v974 = vadd.f32 %v967, %v973
    %v975 = vmul.f32 %v971, %v50
    %v977 = vrot.slane %v975, 1
    %v979 = vadd.f32 %v974, %v977
    %980 = vset.pattern.permute.xlu0 0
    %981 = vperm.xlu0 %980, %v900
    %v982 = vpop.permute.xlu0 %981
    %v984 = vmul.f32 %v982, %v53
    %v986 = vrot.slane %v984, 1
    %v988 = vadd.f32 %v979, %v986
    %990 = vset.pattern.permute.xlu0 0
    %991 = vperm.xlu0 %990, %v905
    %v992 = vpop.permute.xlu0 %991
    %v994 = vmul.f32 %v992, %v56
    %v995 = vadd.f32 %v988, %v994
    %s996 = scalar_lea.vmem %s3, %s866
    %997 = vst [vmem:[%s996] sm:$0x1] %v995
    %s998 = sadd.s32 %s65, 7
    %s999 = scalar_lea.vmem %s0, %s998
    %v1000 = vld [vmem:[%s999] sm:$0x1]
    %s1001 = scalar_lea.vmem %s1, %s998
    %v1002 = vld [vmem:[%s1001] sm:$0x1]
    %v1003 = vadd.f32 %v924, 1e-06
    %v1004 = vrcp.pop %v1003
    %v1005 = vmul.f32 1.0, %v1004
    %v1006 = vsub.f32 %v924, %v75
    %v1007 = vmul.f32 %v1006, %v80
    %s1009 = vtos %v1007
    %v1010 = vstv %s1009
    %v1012 = vmul.f32 %v14, %v1010
    %v1013 = vadd.f32 %v1012, %v15
    %v1014 = vtanh.pop %v1013
    %v1015 = vmul.f32 %v16, %v1014
    %1016 = vadd.xlane.f32.xlu0 %v1015
    %v1017 = vpop.xlane.xlu0 %1016
    %v1018 = vadd.f32 %v1017, %v17
    %v1019 = vtanh.pop %v1018
    %v1020 = vmul.f32 %v1019, 0.5
    %v1021 = vadd.f32 %v1020, 0.5
    %v1022 = vrot.slane %v924, 7
    %v1024 = vmul.f32 %v1021, %v1022
    %v1026 = vrot.slane %v1002, 7
    %v1028 = vmin.f32 %v1024, %v1026
    %v1030 = vrot.slane %v1005, 7
    %v1032 = vmul.f32 %v1028, %v1030
    %v1033 = vsub.f32 1.0, %v1021
    %v1035 = vrot.slane %v1032, 1
    %v1037 = vsub.f32 %v1033, %v1035
    %v1038 = vmul.f32 %v1021, %v924
    %v1040 = vrot.slane %v1000, 5
    %1041 = vrot.lane.b32.xlu0 %v1040, 1
    %v1042 = vpop.permute.xlu0 %1041
    %v1044 = vmul.f32 %v17, %v1042
    %v1045 = vmul.f32 %v1037, %v924
    %v1046 = vrot.slane %v1000, 6
    %1047 = vrot.lane.b32.xlu0 %v1046, 1
    %v1048 = vpop.permute.xlu0 %1047
    %v1050 = vmul.f32 %v17, %v1048
    %v1052 = vrot.slane %v1050, 2
    %1053 = vrot.lane.b32.xlu0 %v1052, 127
    %v1054 = vpop.permute.xlu0 %1053
    %v1056 = vadd.f32 %v1045, %v1054
    %1058 = vset.pattern.permute.xlu0 0
    %1059 = vperm.xlu0 %1058, %v1038
    %v1060 = vpop.permute.xlu0 %1059
    %v1062 = vmul.f32 %v1060, %v32
    %1064 = vset.pattern.permute.xlu0 0
    %1065 = vperm.xlu0 %1064, %v1056
    %v1066 = vpop.permute.xlu0 %1065
    %v1068 = vmul.f32 %v1066, %v35
    %v1069 = vadd.f32 %v1062, %v1068
    %1071 = vset.pattern.permute.xlu0 0
    %1072 = vperm.xlu0 %1071, %v1024
    %v1073 = vpop.permute.xlu0 %1072
    %v1075 = vmul.f32 %v1073, %v38
    %v1077 = vrot.slane %v1075, 1
    %v1079 = vadd.f32 %v1069, %v1077
    %1081 = vset.pattern.permute.xlu0 0
    %1082 = vperm.xlu0 %1081, %v1028
    %v1083 = vpop.permute.xlu0 %1082
    %v1085 = vmul.f32 %v1083, %v41
    %v1087 = vrot.slane %v1085, 1
    %v1089 = vadd.f32 %v1079, %v1087
    %1091 = vset.pattern.permute.xlu0 1
    %1092 = vperm.xlu0 %1091, %v1044
    %v1093 = vpop.permute.xlu0 %1092
    %v1095 = vmul.f32 %v1093, %v44
    %v1097 = vrot.slane %v1095, 3
    %v1099 = vadd.f32 %v1089, %v1097
    %1101 = vset.pattern.permute.xlu0 0
    %1102 = vperm.xlu0 %1101, %v1021
    %v1103 = vpop.permute.xlu0 %1102
    %v1105 = vmul.f32 %v1103, %v47
    %v1106 = vadd.f32 %v1099, %v1105
    %v1107 = vmul.f32 %v1103, %v50
    %v1109 = vrot.slane %v1107, 1
    %v1111 = vadd.f32 %v1106, %v1109
    %1112 = vset.pattern.permute.xlu0 0
    %1113 = vperm.xlu0 %1112, %v1032
    %v1114 = vpop.permute.xlu0 %1113
    %v1116 = vmul.f32 %v1114, %v53
    %v1118 = vrot.slane %v1116, 1
    %v1120 = vadd.f32 %v1111, %v1118
    %1122 = vset.pattern.permute.xlu0 0
    %1123 = vperm.xlu0 %1122, %v1037
    %v1124 = vpop.permute.xlu0 %1123
    %v1126 = vmul.f32 %v1124, %v56
    %v1127 = vadd.f32 %v1120, %v1126
    %s1128 = scalar_lea.vmem %s3, %s998
    %1129 = vst [vmem:[%s1128] sm:$0x1] %v1127
  $region22: #{mcpbrnn_cell_forward.1} parent=0 // loop_footer
    %s63 = sadd.s32 1, %s59
  $region23: #{mcpbrnn_cell_forward.1} parent=0 // loop_footer_branch
    %58 = sbr.rel target = $region19
  $region24: #{mcpbrnn_cell_forward.1} parent=0 // loop_exit
    _
  %vm1130 = vcmask 0
  %1131 = vst.msk [vmem:[#allocation2] sm:$0x1] %vm1130, %v64
  // Predicated region
  $region25: #{mcpbrnn_cell_forward.1} parent=0 // pred_check
    _
  $region26: #{mcpbrnn_cell_forward.1} parent=0 // pred_check_branch
    %1133 = sbr.rel (0) target = $region28
  $region27: #{mcpbrnn_cell_forward.1} parent=0 // pred_region
    _
  $region28: #{mcpbrnn_cell_forward.1} parent=0 // pred_fallthru
    _
  // Predicated region
  $region29: #{mcpbrnn_cell_forward.1} parent=0 // pred_check
    _
  $region30: #{mcpbrnn_cell_forward.1} parent=0 // pred_check_branch
    %1135 = sbr.rel (0) target = $region32
  $region31: #{mcpbrnn_cell_forward.1} parent=0 // pred_region
    _
  $region32: #{mcpbrnn_cell_forward.1} parent=0 // pred_fallthru
    _

</llo_original>
